<compile_context>
chip_gen: v5e
topology: v5e:2x2
jax: 0.10.0
libtpu: 0.0.40
codegen_flags: <defaults>
</compile_context>

<pallas_src>
from functools import partial

import jax
import jax.numpy as jnp
from jax.experimental import pallas as pl
from jax.experimental.pallas import tpu as pltpu


# --------------------------------------------------------------------------
# Fully fused kernel: layer1 conv -> APPNP -> BN/pool/ReLU -> layer2 conv ->
# cross APPNP -> BN/pool/ReLU, one batch sample per grid step.
# --------------------------------------------------------------------------

def _appnp_fused_kernel(p_ref, w1_ref, aux1_ref, w2_ref, aux2_ref, o_ref,
                        *, alpha, slope, wo1):
    f32 = jnp.float32
    nt = (((1,), (1,)), ((), ()))                  # contract last dims: A @ B^T
    wp1 = wo1 // 2                                 # layer-1 pooled width (= layer-2 width)
    wp2 = wp1 // 2                                 # layer-2 pooled width

    # ---- layer-1 conv (+bias) for BOTH branches in one stacked MXU matmul -------------
    aux1 = aux1_ref[...]                           # (N, 3) = [bias | bn_scale | bn_shift]
    h = jax.lax.dot_general(w1_ref[...], p_ref[0], nt,
                            preferred_element_type=f32) + aux1[:, 0:1]     # (N, 2*wo1)
    hx, hn = h[:, :wo1], h[:, wo1:]                # (N, wo1) per branch, channel-major

    # ---- shared helpers ----------------------------------------------------------------
    def appnp_mix(h1, h2):
        # a[n,m] = sum_f h1[n,f] h2[m,f]; LeakyReLU(0.2); softmax over dim=1 (rows n);
        # single propagation step (matches the reference forward, K = 1) with alpha = 0.9.
        a = jax.lax.dot_general(h1, h2, nt, preferred_element_type=f32)    # (N, N)
        a = jnp.maximum(a, slope * a)                                      # LeakyReLU
        a = a - jnp.max(a, axis=0, keepdims=True)
        e = jnp.exp(a)
        p = e / jnp.sum(e, axis=0, keepdims=True)                          # exact softmax
        prop = jnp.dot(p, h1, preferred_element_type=f32)                  # (N, F)
        return (1.0 - alpha) * prop + alpha * h1                           # direct axpy

    def pool_mats(wout):
        # 0/1 lane-selection matrices so the 2:1 width max-pool runs as two tiny MXU
        # matmuls (avoids strided value slices / lane-splitting reshapes in Mosaic).
        r = jax.lax.broadcasted_iota(jnp.int32, (2 * wout, wout), 0)
        c = jax.lax.broadcasted_iota(jnp.int32, (2 * wout, wout), 1)
        return (r == 2 * c).astype(f32), (r == 2 * c + 1).astype(f32)

    def pool_relu(y, wout, se, so):                # BN already applied: pool, then ReLU
        yt = y[:, : 2 * wout]                      # drops a trailing odd column like PyTorch
        ev = jnp.dot(yt, se, preferred_element_type=f32)
        od = jnp.dot(yt, so, preferred_element_type=f32)
        return jnp.maximum(jnp.maximum(ev, od), 0.0)

    se1, so1 = pool_mats(wp1)
    se2, so2 = pool_mats(wp2)

    # ---- layer 1: self-propagation (feat1(x,x) / feat1(n,n)), BN, pool, ReLU -----------
    s1, t1 = aux1[:, 1:2], aux1[:, 2:3]
    ax = pool_relu(appnp_mix(hx, hx) * s1 + t1, wp1, se1, so1)             # (N, wp1)
    an = pool_relu(appnp_mix(hn, hn) * s1 + t1, wp1, se1, so1)

    # ---- layer 2: conv (1,5), circular pad 2, as 5 stacked matmuls ---------------------
    aux2 = aux2_ref[...]                           # (N, 3)
    b2, s2, t2 = aux2[:, 0:1], aux2[:, 1:2], aux2[:, 2:3]

    def conv2(a1):                                 # (N, wp1) -> (N, wp1)
        xp = jnp.concatenate([a1[:, wp1 - 2:], a1, a1[:, :2]], axis=1)     # circular pad
        acc = jnp.dot(w2_ref[0], xp[:, 0:wp1], preferred_element_type=f32)
        for kw in range(1, 5):                     # static, fully unrolled
            acc = acc + jnp.dot(w2_ref[kw], xp[:, kw:kw + wp1],
                                preferred_element_type=f32)
        return acc + b2

    h2x, h2n = conv2(ax), conv2(an)
    yx = appnp_mix(h2x, h2n) * s2 + t2             # feat2(x, n)
    yn = appnp_mix(h2n, h2x) * s2 + t2             # feat2(n, x)

    # ---- pooled features of both branches, concatenated along lanes --------------------
    o_ref[0] = jnp.concatenate(
        [pool_relu(yx, wp2, se2, so2), pool_relu(yn, wp2, se2, so2)], axis=1)


def appnp_fused(patches, w1, aux1, w2k, aux2, *, wo1, alpha=0.9, slope=0.2):
    """patches: (B, 2*wo1, K1) im2col rows stacked as [x-branch | n-branch] per sample.
    Returns (B, N, 2*((wo1//2)//2)) pooled layer-2 features of both branches."""
    B, rows, K1 = patches.shape
    N = w1.shape[0]
    out_w = 2 * ((wo1 // 2) // 2)

    kern = partial(_appnp_fused_kernel, alpha=alpha, slope=slope, wo1=wo1)
    return pl.pallas_call(
        kern,
        out_shape=jax.ShapeDtypeStruct((B, N, out_w), jnp.float32),
        grid=(B,),
        in_specs=[
            pl.BlockSpec((1, rows, K1), lambda b: (b, 0, 0)),
            pl.BlockSpec(w1.shape, lambda b: (0, 0)),
            pl.BlockSpec(aux1.shape, lambda b: (0, 0)),
            pl.BlockSpec(w2k.shape, lambda b: (0, 0, 0)),
            pl.BlockSpec(aux2.shape, lambda b: (0, 0)),
        ],
        out_specs=pl.BlockSpec((1, N, out_w), lambda b: (b, 0, 0)),
        compiler_params=pltpu.CompilerParams(dimension_semantics=("parallel",)),
    )(patches, w1, aux1, w2k, aux2)


# --------------------------------------------------------------------------
# Small XLA glue: layer-1 im2col (static circular pad), BN folding, head.
# --------------------------------------------------------------------------

def im2col_full_height(x, KW, pw):
    """x: (B, Cin, H, W); kernel (KH=H, KW), stride 1, circular width pad pw, Ho=1.
    Returns (B, Wo, Cin*H*KW); flattening order (cin, kh, kw) matches
    weight.reshape(Cout, Cin*KH*KW)."""
    B, Cin, H, W = x.shape
    xp = jnp.pad(x, ((0, 0), (0, 0), (0, 0), (pw, pw)), mode="wrap")
    Wo = W + 2 * pw - KW + 1
    cols = jnp.stack([xp[..., kw:kw + Wo] for kw in range(KW)], axis=3)  # (B,Cin,H,KW,Wo)
    return cols.transpose(0, 4, 1, 2, 3).reshape(B, Wo, Cin * H * KW)


def _bn_scale_shift(bn, eps=1e-5):
    scale = bn["gamma"] * jax.lax.rsqrt(bn["var"] + eps)
    shift = bn["beta"] - bn["mean"] * scale
    return scale, shift


# --------------------------------------------------------------------------
# Forward pass + parameter init
# --------------------------------------------------------------------------

def appnp_forward(x, params):
    """x: (B, 5, 5, 2*25) NCHW."""
    assert x.shape[-1] % 2 == 0
    B, Wh = x.shape[0], x.shape[-1] // 2
    xb, nb = x[..., :Wh], x[..., Wh:]

    # Layer-1 im2col for both branches, stacked on the row axis -> (B, 2*25, 275).
    patches = jnp.concatenate(
        [im2col_full_height(xb, KW=11, pw=5), im2col_full_height(nb, KW=11, pw=5)], axis=1)

    # Layer-1 params: conv weight in native (Cout, Cin*KH*KW) layout; bias/BN folded into
    # one (32, 3) aux array = [bias | scale | shift].
    w1 = params["feat1"]["w"].reshape(32, -1).astype(jnp.float32)          # (32, 275)
    s1, t1 = _bn_scale_shift(params["acvt1"])
    aux1 = jnp.stack([params["feat1"]["b"], s1, t1], axis=1).astype(jnp.float32)

    # Layer-2 conv weight split per kernel-width tap: (5, 32, 32) with w2k[kw] = W[:,:,0,kw].
    w2k = params["feat2"]["w"][:, :, 0, :].transpose(2, 0, 1).astype(jnp.float32)
    s2, t2 = _bn_scale_shift(params["acvt2"])
    aux2 = jnp.stack([params["feat2"]["b"], s2, t2], axis=1).astype(jnp.float32)

    # One fused Pallas call for both GraphAppnp layers + BN + pools + ReLUs.
    feat = appnp_fused(patches, w1, aux1, w2k, aux2, wo1=Wh)               # (B, 32, 12)

    # Head: Flatten + Dropout(0.2)(eval=identity) + Linear(384, 13) — tiny, left to XLA
    # (in-kernel (32,12)->(1,384) flatten is a risky Mosaic reshape for a 3 KB tensor).
    return feat.reshape(B, -1) @ params["lin_w"].T + params["lin_b"]


def _conv_params(key, cout, cin, kh, kw):
    k1, k2 = jax.random.split(key)
    bound = float(cin * kh * kw) ** -0.5
    return {"w": jax.random.uniform(k1, (cout, cin, kh, kw), jnp.float32, -bound, bound),
            "b": jax.random.uniform(k2, (cout,), jnp.float32, -bound, bound)}


def _bn_params(key, c):
    k1, k2 = jax.random.split(key)
    return {"gamma": jax.random.uniform(k1, (c,), jnp.float32, 0.5, 1.5),
            "beta": 0.1 * jax.random.normal(k2, (c,), jnp.float32),
            "mean": jnp.zeros((c,), jnp.float32),
            "var": jnp.ones((c,), jnp.float32)}


def init_params(key):
    ks = jax.random.split(key, 6)
    bound = float(32 * 12) ** -0.5
    return {
        "feat1": _conv_params(ks[0], 32, 5, 5, 11),
        "acvt1": _bn_params(ks[1], 32),
        "feat2": _conv_params(ks[2], 32, 32, 1, 5),
        "acvt2": _bn_params(ks[3], 32),
        "lin_w": jax.random.uniform(ks[4], (13, 32 * 12), jnp.float32, -bound, bound),
        "lin_b": jax.random.uniform(ks[5], (13,), jnp.float32, -bound, bound),
    }


if __name__ == "__main__":
    key = jax.random.PRNGKey(0)
    kp, kx = jax.random.split(key)
    params = init_params(kp)
    # Input NCHW: (batch=2, channels=5, height=5, width=50); width splits into 25 + 25.
    x = jax.random.normal(kx, (2, 5, 5, 50), jnp.float32)
    out = jax.block_until_ready(jax.jit(appnp_forward)(x, params))
    assert out.shape == (2, 13) and out.dtype == jnp.float32
    print("KERNEL_OK")
</pallas_src>

<mosaic_0001>
module attributes {stable_mosaic.version = 11 : i64} {
  func.func @_appnp_fused_kernel(%arg0: i32, %arg1: memref<1x50x275xf32, #tpu.memory_space<vmem>>, %arg2: memref<32x275xf32, #tpu.memory_space<vmem>>, %arg3: memref<32x3xf32, #tpu.memory_space<vmem>>, %arg4: memref<5x32x32xf32, #tpu.memory_space<vmem>>, %arg5: memref<32x3xf32, #tpu.memory_space<vmem>>, %arg6: memref<1x32x12xf32, #tpu.memory_space<vmem>>) attributes {dimension_semantics = [#tpu.dimension_semantics<parallel>], iteration_bounds = array<i64: 2>, scalar_prefetch = 0 : i64, scratch_operands = 0 : i64, tpu.core_type = #tpu.core_type<tc>, window_params = [{transform_indices = @transform_0, window_bounds = array<i64: 1, 50, 275>}, {pipeline_mode = #tpu.pipeline_mode<synchronous>, transform_indices = @transform_1, window_bounds = array<i64: 32, 275>}, {pipeline_mode = #tpu.pipeline_mode<synchronous>, transform_indices = @transform_2, window_bounds = array<i64: 32, 3>}, {pipeline_mode = #tpu.pipeline_mode<synchronous>, transform_indices = @transform_3, window_bounds = array<i64: 5, 32, 32>}, {pipeline_mode = #tpu.pipeline_mode<synchronous>, transform_indices = @transform_4, window_bounds = array<i64: 32, 3>}, {transform_indices = @transform_5, window_bounds = array<i64: 1, 32, 12>}]} {
    %c0 = arith.constant 0 : index
    %c0_0 = arith.constant 0 : index
    %0 = vector.load %arg3[%c0, %c0_0] : memref<32x3xf32, #tpu.memory_space<vmem>>, vector<32x3xf32>
    %c0_1 = arith.constant 0 : index
    %c0_2 = arith.constant 0 : index
    %1 = vector.load %arg2[%c0_1, %c0_2] : memref<32x275xf32, #tpu.memory_space<vmem>>, vector<32x275xf32>
    %c0_3 = arith.constant 0 : index
    %c0_4 = arith.constant 0 : index
    %c0_5 = arith.constant 0 : index
    %2 = vector.load %arg1[%c0_3, %c0_4, %c0_5] : memref<1x50x275xf32, #tpu.memory_space<vmem>>, vector<1x50x275xf32>
    %3 = vector.shape_cast %2 : vector<1x50x275xf32> to vector<50x275xf32>
    %cst = arith.constant dense<0.000000e+00> : vector<32x50xf32>
    %4 = tpu.matmul %1, %3, %cst {dimension_numbers = #tpu.dot_dimension_numbers<[1], [1], [0], [0], [0, 0, 1, 0], [], []>} : vector<32x275xf32>, vector<50x275xf32>, vector<32x50xf32> -> vector<32x50xf32>
    %5 = vector.extract_strided_slice %0 {offsets = [0, 0], sizes = [32, 1], strides = [1, 1]} : vector<32x3xf32> to vector<32x1xf32>
    %6 = vector.broadcast %5 : vector<32x1xf32> to vector<32x50xf32>
    %7 = arith.addf %4, %6 : vector<32x50xf32>
    %8 = vector.extract_strided_slice %7 {offsets = [0, 0], sizes = [32, 25], strides = [1, 1]} : vector<32x50xf32> to vector<32x25xf32>
    %9 = vector.extract_strided_slice %7 {offsets = [0, 25], sizes = [32, 25], strides = [1, 1]} : vector<32x50xf32> to vector<32x25xf32>
    %10 = tpu.iota {dimensions = array<i32: 0>} : vector<24x12xi32>
    %11 = tpu.iota {dimensions = array<i32: 1>} : vector<24x12xi32>
    %c2_i32 = arith.constant 2 : i32
    %12 = vector.broadcast %c2_i32 : i32 to vector<24x12xi32>
    %13 = arith.muli %12, %11 : vector<24x12xi32>
    %14 = arith.cmpi eq, %10, %13 : vector<24x12xi32>
    %15 = arith.extui %14 : vector<24x12xi1> to vector<24x12xi32>
    %16 = arith.sitofp %15 : vector<24x12xi32> to vector<24x12xf32>
    %c2_i32_6 = arith.constant 2 : i32
    %17 = vector.broadcast %c2_i32_6 : i32 to vector<24x12xi32>
    %18 = arith.muli %17, %11 : vector<24x12xi32>
    %c1_i32 = arith.constant 1 : i32
    %19 = vector.broadcast %c1_i32 : i32 to vector<24x12xi32>
    %20 = arith.addi %18, %19 : vector<24x12xi32>
    %21 = arith.cmpi eq, %10, %20 : vector<24x12xi32>
    %22 = arith.extui %21 : vector<24x12xi1> to vector<24x12xi32>
    %23 = arith.sitofp %22 : vector<24x12xi32> to vector<24x12xf32>
    %24 = tpu.iota {dimensions = array<i32: 0>} : vector<12x6xi32>
    %25 = tpu.iota {dimensions = array<i32: 1>} : vector<12x6xi32>
    %c2_i32_7 = arith.constant 2 : i32
    %26 = vector.broadcast %c2_i32_7 : i32 to vector<12x6xi32>
    %27 = arith.muli %26, %25 : vector<12x6xi32>
    %28 = arith.cmpi eq, %24, %27 : vector<12x6xi32>
    %29 = arith.extui %28 : vector<12x6xi1> to vector<12x6xi32>
    %30 = arith.sitofp %29 : vector<12x6xi32> to vector<12x6xf32>
    %c2_i32_8 = arith.constant 2 : i32
    %31 = vector.broadcast %c2_i32_8 : i32 to vector<12x6xi32>
    %32 = arith.muli %31, %25 : vector<12x6xi32>
    %c1_i32_9 = arith.constant 1 : i32
    %33 = vector.broadcast %c1_i32_9 : i32 to vector<12x6xi32>
    %34 = arith.addi %32, %33 : vector<12x6xi32>
    %35 = arith.cmpi eq, %24, %34 : vector<12x6xi32>
    %36 = arith.extui %35 : vector<12x6xi1> to vector<12x6xi32>
    %37 = arith.sitofp %36 : vector<12x6xi32> to vector<12x6xf32>
    %38 = vector.extract_strided_slice %0 {offsets = [0, 1], sizes = [32, 1], strides = [1, 1]} : vector<32x3xf32> to vector<32x1xf32>
    %39 = vector.extract_strided_slice %0 {offsets = [0, 2], sizes = [32, 1], strides = [1, 1]} : vector<32x3xf32> to vector<32x1xf32>
    %cst_10 = arith.constant dense<0.000000e+00> : vector<32x32xf32>
    %40 = tpu.matmul %8, %8, %cst_10 {dimension_numbers = #tpu.dot_dimension_numbers<[1], [1], [0], [0], [0, 0, 1, 0], [], []>} : vector<32x25xf32>, vector<32x25xf32>, vector<32x32xf32> -> vector<32x32xf32>
    %cst_11 = arith.constant 2.000000e-01 : f32
    %41 = vector.broadcast %cst_11 : f32 to vector<32x32xf32>
    %42 = arith.mulf %41, %40 : vector<32x32xf32>
    %43 = arith.maximumf %40, %42 : vector<32x32xf32>
    %cst_12 = arith.constant dense<0xFF800000> : vector<32xf32>
    %44 = vector.multi_reduction <maximumf>, %43, %cst_12 [0] : vector<32x32xf32> to vector<32xf32>
    %45 = vector.shape_cast %44 : vector<32xf32> to vector<1x32xf32>
    %46 = vector.broadcast %45 : vector<1x32xf32> to vector<32x32xf32>
    %47 = arith.subf %43, %46 : vector<32x32xf32>
    %48 = math.exp %47 : vector<32x32xf32>
    %cst_13 = arith.constant dense<0.000000e+00> : vector<32xf32>
    %49 = vector.multi_reduction <add>, %48, %cst_13 [0] : vector<32x32xf32> to vector<32xf32>
    %50 = vector.shape_cast %49 : vector<32xf32> to vector<1x32xf32>
    %51 = vector.broadcast %50 : vector<1x32xf32> to vector<32x32xf32>
    %52 = arith.divf %48, %51 : vector<32x32xf32>
    %cst_14 = arith.constant dense<0.000000e+00> : vector<32x25xf32>
    %53 = tpu.matmul %52, %8, %cst_14 {dimension_numbers = #tpu.dot_dimension_numbers<[1], [0], [0], [1], [0, 0, 1, 1], [], []>} : vector<32x32xf32>, vector<32x25xf32>, vector<32x25xf32> -> vector<32x25xf32>
    %cst_15 = arith.constant 1.000000e-01 : f32
    %54 = vector.broadcast %cst_15 : f32 to vector<32x25xf32>
    %55 = arith.mulf %54, %53 : vector<32x25xf32>
    %cst_16 = arith.constant 0.899999976 : f32
    %56 = vector.broadcast %cst_16 : f32 to vector<32x25xf32>
    %57 = arith.mulf %56, %8 : vector<32x25xf32>
    %58 = arith.addf %55, %57 : vector<32x25xf32>
    %59 = vector.broadcast %38 : vector<32x1xf32> to vector<32x25xf32>
    %60 = arith.mulf %58, %59 : vector<32x25xf32>
    %61 = vector.broadcast %39 : vector<32x1xf32> to vector<32x25xf32>
    %62 = arith.addf %60, %61 : vector<32x25xf32>
    %63 = vector.extract_strided_slice %62 {offsets = [0, 0], sizes = [32, 24], strides = [1, 1]} : vector<32x25xf32> to vector<32x24xf32>
    %cst_17 = arith.constant dense<0.000000e+00> : vector<32x12xf32>
    %64 = tpu.matmul %63, %16, %cst_17 {dimension_numbers = #tpu.dot_dimension_numbers<[1], [0], [0], [1], [0, 0, 1, 1], [], []>} : vector<32x24xf32>, vector<24x12xf32>, vector<32x12xf32> -> vector<32x12xf32>
    %cst_18 = arith.constant dense<0.000000e+00> : vector<32x12xf32>
    %65 = tpu.matmul %63, %23, %cst_18 {dimension_numbers = #tpu.dot_dimension_numbers<[1], [0], [0], [1], [0, 0, 1, 1], [], []>} : vector<32x24xf32>, vector<24x12xf32>, vector<32x12xf32> -> vector<32x12xf32>
    %66 = arith.maximumf %64, %65 : vector<32x12xf32>
    %cst_19 = arith.constant 0.000000e+00 : f32
    %67 = vector.broadcast %cst_19 : f32 to vector<32x12xf32>
    %68 = arith.maximumf %66, %67 : vector<32x12xf32>
    %cst_20 = arith.constant dense<0.000000e+00> : vector<32x32xf32>
    %69 = tpu.matmul %9, %9, %cst_20 {dimension_numbers = #tpu.dot_dimension_numbers<[1], [1], [0], [0], [0, 0, 1, 0], [], []>} : vector<32x25xf32>, vector<32x25xf32>, vector<32x32xf32> -> vector<32x32xf32>
    %cst_21 = arith.constant 2.000000e-01 : f32
    %70 = vector.broadcast %cst_21 : f32 to vector<32x32xf32>
    %71 = arith.mulf %70, %69 : vector<32x32xf32>
    %72 = arith.maximumf %69, %71 : vector<32x32xf32>
    %cst_22 = arith.constant dense<0xFF800000> : vector<32xf32>
    %73 = vector.multi_reduction <maximumf>, %72, %cst_22 [0] : vector<32x32xf32> to vector<32xf32>
    %74 = vector.shape_cast %73 : vector<32xf32> to vector<1x32xf32>
    %75 = vector.broadcast %74 : vector<1x32xf32> to vector<32x32xf32>
    %76 = arith.subf %72, %75 : vector<32x32xf32>
    %77 = math.exp %76 : vector<32x32xf32>
    %cst_23 = arith.constant dense<0.000000e+00> : vector<32xf32>
    %78 = vector.multi_reduction <add>, %77, %cst_23 [0] : vector<32x32xf32> to vector<32xf32>
    %79 = vector.shape_cast %78 : vector<32xf32> to vector<1x32xf32>
    %80 = vector.broadcast %79 : vector<1x32xf32> to vector<32x32xf32>
    %81 = arith.divf %77, %80 : vector<32x32xf32>
    %cst_24 = arith.constant dense<0.000000e+00> : vector<32x25xf32>
    %82 = tpu.matmul %81, %9, %cst_24 {dimension_numbers = #tpu.dot_dimension_numbers<[1], [0], [0], [1], [0, 0, 1, 1], [], []>} : vector<32x32xf32>, vector<32x25xf32>, vector<32x25xf32> -> vector<32x25xf32>
    %cst_25 = arith.constant 1.000000e-01 : f32
    %83 = vector.broadcast %cst_25 : f32 to vector<32x25xf32>
    %84 = arith.mulf %83, %82 : vector<32x25xf32>
    %cst_26 = arith.constant 0.899999976 : f32
    %85 = vector.broadcast %cst_26 : f32 to vector<32x25xf32>
    %86 = arith.mulf %85, %9 : vector<32x25xf32>
    %87 = arith.addf %84, %86 : vector<32x25xf32>
    %88 = vector.broadcast %38 : vector<32x1xf32> to vector<32x25xf32>
    %89 = arith.mulf %87, %88 : vector<32x25xf32>
    %90 = vector.broadcast %39 : vector<32x1xf32> to vector<32x25xf32>
    %91 = arith.addf %89, %90 : vector<32x25xf32>
    %92 = vector.extract_strided_slice %91 {offsets = [0, 0], sizes = [32, 24], strides = [1, 1]} : vector<32x25xf32> to vector<32x24xf32>
    %cst_27 = arith.constant dense<0.000000e+00> : vector<32x12xf32>
    %93 = tpu.matmul %92, %16, %cst_27 {dimension_numbers = #tpu.dot_dimension_numbers<[1], [0], [0], [1], [0, 0, 1, 1], [], []>} : vector<32x24xf32>, vector<24x12xf32>, vector<32x12xf32> -> vector<32x12xf32>
    %cst_28 = arith.constant dense<0.000000e+00> : vector<32x12xf32>
    %94 = tpu.matmul %92, %23, %cst_28 {dimension_numbers = #tpu.dot_dimension_numbers<[1], [0], [0], [1], [0, 0, 1, 1], [], []>} : vector<32x24xf32>, vector<24x12xf32>, vector<32x12xf32> -> vector<32x12xf32>
    %95 = arith.maximumf %93, %94 : vector<32x12xf32>
    %cst_29 = arith.constant 0.000000e+00 : f32
    %96 = vector.broadcast %cst_29 : f32 to vector<32x12xf32>
    %97 = arith.maximumf %95, %96 : vector<32x12xf32>
    %c0_30 = arith.constant 0 : index
    %c0_31 = arith.constant 0 : index
    %98 = vector.load %arg5[%c0_30, %c0_31] : memref<32x3xf32, #tpu.memory_space<vmem>>, vector<32x3xf32>
    %99 = vector.extract_strided_slice %98 {offsets = [0, 0], sizes = [32, 1], strides = [1, 1]} : vector<32x3xf32> to vector<32x1xf32>
    %100 = vector.extract_strided_slice %98 {offsets = [0, 1], sizes = [32, 1], strides = [1, 1]} : vector<32x3xf32> to vector<32x1xf32>
    %101 = vector.extract_strided_slice %98 {offsets = [0, 2], sizes = [32, 1], strides = [1, 1]} : vector<32x3xf32> to vector<32x1xf32>
    %102 = vector.extract_strided_slice %68 {offsets = [0, 10], sizes = [32, 2], strides = [1, 1]} : vector<32x12xf32> to vector<32x2xf32>
    %103 = vector.extract_strided_slice %68 {offsets = [0, 0], sizes = [32, 2], strides = [1, 1]} : vector<32x12xf32> to vector<32x2xf32>
    %104 = tpu.concatenate %102, %68, %103 in 1 : vector<32x2xf32>, vector<32x12xf32>, vector<32x2xf32> -> vector<32x16xf32>
    %c0_32 = arith.constant 0 : index
    %c0_33 = arith.constant 0 : index
    %c0_34 = arith.constant 0 : index
    %105 = vector.load %arg4[%c0_32, %c0_33, %c0_34] : memref<5x32x32xf32, #tpu.memory_space<vmem>>, vector<1x32x32xf32>
    %106 = vector.shape_cast %105 : vector<1x32x32xf32> to vector<32x32xf32>
    %107 = vector.extract_strided_slice %104 {offsets = [0, 0], sizes = [32, 12], strides = [1, 1]} : vector<32x16xf32> to vector<32x12xf32>
    %cst_35 = arith.constant dense<0.000000e+00> : vector<32x12xf32>
    %108 = tpu.matmul %106, %107, %cst_35 {dimension_numbers = #tpu.dot_dimension_numbers<[1], [0], [0], [1], [0, 0, 1, 1], [], []>} : vector<32x32xf32>, vector<32x12xf32>, vector<32x12xf32> -> vector<32x12xf32>
    %c1 = arith.constant 1 : index
    %c0_36 = arith.constant 0 : index
    %c0_37 = arith.constant 0 : index
    %109 = vector.load %arg4[%c1, %c0_36, %c0_37] : memref<5x32x32xf32, #tpu.memory_space<vmem>>, vector<1x32x32xf32>
    %110 = vector.shape_cast %109 : vector<1x32x32xf32> to vector<32x32xf32>
    %111 = vector.extract_strided_slice %104 {offsets = [0, 1], sizes = [32, 12], strides = [1, 1]} : vector<32x16xf32> to vector<32x12xf32>
    %cst_38 = arith.constant dense<0.000000e+00> : vector<32x12xf32>
    %112 = tpu.matmul %110, %111, %cst_38 {dimension_numbers = #tpu.dot_dimension_numbers<[1], [0], [0], [1], [0, 0, 1, 1], [], []>} : vector<32x32xf32>, vector<32x12xf32>, vector<32x12xf32> -> vector<32x12xf32>
    %113 = arith.addf %108, %112 : vector<32x12xf32>
    %c2 = arith.constant 2 : index
    %c0_39 = arith.constant 0 : index
    %c0_40 = arith.constant 0 : index
    %114 = vector.load %arg4[%c2, %c0_39, %c0_40] : memref<5x32x32xf32, #tpu.memory_space<vmem>>, vector<1x32x32xf32>
    %115 = vector.shape_cast %114 : vector<1x32x32xf32> to vector<32x32xf32>
    %116 = vector.extract_strided_slice %104 {offsets = [0, 2], sizes = [32, 12], strides = [1, 1]} : vector<32x16xf32> to vector<32x12xf32>
    %cst_41 = arith.constant dense<0.000000e+00> : vector<32x12xf32>
    %117 = tpu.matmul %115, %116, %cst_41 {dimension_numbers = #tpu.dot_dimension_numbers<[1], [0], [0], [1], [0, 0, 1, 1], [], []>} : vector<32x32xf32>, vector<32x12xf32>, vector<32x12xf32> -> vector<32x12xf32>
    %118 = arith.addf %113, %117 : vector<32x12xf32>
    %c3 = arith.constant 3 : index
    %c0_42 = arith.constant 0 : index
    %c0_43 = arith.constant 0 : index
    %119 = vector.load %arg4[%c3, %c0_42, %c0_43] : memref<5x32x32xf32, #tpu.memory_space<vmem>>, vector<1x32x32xf32>
    %120 = vector.shape_cast %119 : vector<1x32x32xf32> to vector<32x32xf32>
    %121 = vector.extract_strided_slice %104 {offsets = [0, 3], sizes = [32, 12], strides = [1, 1]} : vector<32x16xf32> to vector<32x12xf32>
    %cst_44 = arith.constant dense<0.000000e+00> : vector<32x12xf32>
    %122 = tpu.matmul %120, %121, %cst_44 {dimension_numbers = #tpu.dot_dimension_numbers<[1], [0], [0], [1], [0, 0, 1, 1], [], []>} : vector<32x32xf32>, vector<32x12xf32>, vector<32x12xf32> -> vector<32x12xf32>
    %123 = arith.addf %118, %122 : vector<32x12xf32>
    %c4 = arith.constant 4 : index
    %c0_45 = arith.constant 0 : index
    %c0_46 = arith.constant 0 : index
    %124 = vector.load %arg4[%c4, %c0_45, %c0_46] : memref<5x32x32xf32, #tpu.memory_space<vmem>>, vector<1x32x32xf32>
    %125 = vector.shape_cast %124 : vector<1x32x32xf32> to vector<32x32xf32>
    %126 = vector.extract_strided_slice %104 {offsets = [0, 4], sizes = [32, 12], strides = [1, 1]} : vector<32x16xf32> to vector<32x12xf32>
    %cst_47 = arith.constant dense<0.000000e+00> : vector<32x12xf32>
    %127 = tpu.matmul %125, %126, %cst_47 {dimension_numbers = #tpu.dot_dimension_numbers<[1], [0], [0], [1], [0, 0, 1, 1], [], []>} : vector<32x32xf32>, vector<32x12xf32>, vector<32x12xf32> -> vector<32x12xf32>
    %128 = arith.addf %123, %127 : vector<32x12xf32>
    %129 = vector.broadcast %99 : vector<32x1xf32> to vector<32x12xf32>
    %130 = arith.addf %128, %129 : vector<32x12xf32>
    %131 = vector.extract_strided_slice %97 {offsets = [0, 10], sizes = [32, 2], strides = [1, 1]} : vector<32x12xf32> to vector<32x2xf32>
    %132 = vector.extract_strided_slice %97 {offsets = [0, 0], sizes = [32, 2], strides = [1, 1]} : vector<32x12xf32> to vector<32x2xf32>
    %133 = tpu.concatenate %131, %97, %132 in 1 : vector<32x2xf32>, vector<32x12xf32>, vector<32x2xf32> -> vector<32x16xf32>
    %c0_48 = arith.constant 0 : index
    %c0_49 = arith.constant 0 : index
    %c0_50 = arith.constant 0 : index
    %134 = vector.load %arg4[%c0_48, %c0_49, %c0_50] : memref<5x32x32xf32, #tpu.memory_space<vmem>>, vector<1x32x32xf32>
    %135 = vector.shape_cast %134 : vector<1x32x32xf32> to vector<32x32xf32>
    %136 = vector.extract_strided_slice %133 {offsets = [0, 0], sizes = [32, 12], strides = [1, 1]} : vector<32x16xf32> to vector<32x12xf32>
    %cst_51 = arith.constant dense<0.000000e+00> : vector<32x12xf32>
    %137 = tpu.matmul %135, %136, %cst_51 {dimension_numbers = #tpu.dot_dimension_numbers<[1], [0], [0], [1], [0, 0, 1, 1], [], []>} : vector<32x32xf32>, vector<32x12xf32>, vector<32x12xf32> -> vector<32x12xf32>
    %c1_52 = arith.constant 1 : index
    %c0_53 = arith.constant 0 : index
    %c0_54 = arith.constant 0 : index
    %138 = vector.load %arg4[%c1_52, %c0_53, %c0_54] : memref<5x32x32xf32, #tpu.memory_space<vmem>>, vector<1x32x32xf32>
    %139 = vector.shape_cast %138 : vector<1x32x32xf32> to vector<32x32xf32>
    %140 = vector.extract_strided_slice %133 {offsets = [0, 1], sizes = [32, 12], strides = [1, 1]} : vector<32x16xf32> to vector<32x12xf32>
    %cst_55 = arith.constant dense<0.000000e+00> : vector<32x12xf32>
    %141 = tpu.matmul %139, %140, %cst_55 {dimension_numbers = #tpu.dot_dimension_numbers<[1], [0], [0], [1], [0, 0, 1, 1], [], []>} : vector<32x32xf32>, vector<32x12xf32>, vector<32x12xf32> -> vector<32x12xf32>
    %142 = arith.addf %137, %141 : vector<32x12xf32>
    %c2_56 = arith.constant 2 : index
    %c0_57 = arith.constant 0 : index
    %c0_58 = arith.constant 0 : index
    %143 = vector.load %arg4[%c2_56, %c0_57, %c0_58] : memref<5x32x32xf32, #tpu.memory_space<vmem>>, vector<1x32x32xf32>
    %144 = vector.shape_cast %143 : vector<1x32x32xf32> to vector<32x32xf32>
    %145 = vector.extract_strided_slice %133 {offsets = [0, 2], sizes = [32, 12], strides = [1, 1]} : vector<32x16xf32> to vector<32x12xf32>
    %cst_59 = arith.constant dense<0.000000e+00> : vector<32x12xf32>
    %146 = tpu.matmul %144, %145, %cst_59 {dimension_numbers = #tpu.dot_dimension_numbers<[1], [0], [0], [1], [0, 0, 1, 1], [], []>} : vector<32x32xf32>, vector<32x12xf32>, vector<32x12xf32> -> vector<32x12xf32>
    %147 = arith.addf %142, %146 : vector<32x12xf32>
    %c3_60 = arith.constant 3 : index
    %c0_61 = arith.constant 0 : index
    %c0_62 = arith.constant 0 : index
    %148 = vector.load %arg4[%c3_60, %c0_61, %c0_62] : memref<5x32x32xf32, #tpu.memory_space<vmem>>, vector<1x32x32xf32>
    %149 = vector.shape_cast %148 : vector<1x32x32xf32> to vector<32x32xf32>
    %150 = vector.extract_strided_slice %133 {offsets = [0, 3], sizes = [32, 12], strides = [1, 1]} : vector<32x16xf32> to vector<32x12xf32>
    %cst_63 = arith.constant dense<0.000000e+00> : vector<32x12xf32>
    %151 = tpu.matmul %149, %150, %cst_63 {dimension_numbers = #tpu.dot_dimension_numbers<[1], [0], [0], [1], [0, 0, 1, 1], [], []>} : vector<32x32xf32>, vector<32x12xf32>, vector<32x12xf32> -> vector<32x12xf32>
    %152 = arith.addf %147, %151 : vector<32x12xf32>
    %c4_64 = arith.constant 4 : index
    %c0_65 = arith.constant 0 : index
    %c0_66 = arith.constant 0 : index
    %153 = vector.load %arg4[%c4_64, %c0_65, %c0_66] : memref<5x32x32xf32, #tpu.memory_space<vmem>>, vector<1x32x32xf32>
    %154 = vector.shape_cast %153 : vector<1x32x32xf32> to vector<32x32xf32>
    %155 = vector.extract_strided_slice %133 {offsets = [0, 4], sizes = [32, 12], strides = [1, 1]} : vector<32x16xf32> to vector<32x12xf32>
    %cst_67 = arith.constant dense<0.000000e+00> : vector<32x12xf32>
    %156 = tpu.matmul %154, %155, %cst_67 {dimension_numbers = #tpu.dot_dimension_numbers<[1], [0], [0], [1], [0, 0, 1, 1], [], []>} : vector<32x32xf32>, vector<32x12xf32>, vector<32x12xf32> -> vector<32x12xf32>
    %157 = arith.addf %152, %156 : vector<32x12xf32>
    %158 = vector.broadcast %99 : vector<32x1xf32> to vector<32x12xf32>
    %159 = arith.addf %157, %158 : vector<32x12xf32>
    %cst_68 = arith.constant dense<0.000000e+00> : vector<32x32xf32>
    %160 = tpu.matmul %130, %159, %cst_68 {dimension_numbers = #tpu.dot_dimension_numbers<[1], [1], [0], [0], [0, 0, 1, 0], [], []>} : vector<32x12xf32>, vector<32x12xf32>, vector<32x32xf32> -> vector<32x32xf32>
    %cst_69 = arith.constant 2.000000e-01 : f32
    %161 = vector.broadcast %cst_69 : f32 to vector<32x32xf32>
    %162 = arith.mulf %161, %160 : vector<32x32xf32>
    %163 = arith.maximumf %160, %162 : vector<32x32xf32>
    %cst_70 = arith.constant dense<0xFF800000> : vector<32xf32>
    %164 = vector.multi_reduction <maximumf>, %163, %cst_70 [0] : vector<32x32xf32> to vector<32xf32>
    %165 = vector.shape_cast %164 : vector<32xf32> to vector<1x32xf32>
    %166 = vector.broadcast %165 : vector<1x32xf32> to vector<32x32xf32>
    %167 = arith.subf %163, %166 : vector<32x32xf32>
    %168 = math.exp %167 : vector<32x32xf32>
    %cst_71 = arith.constant dense<0.000000e+00> : vector<32xf32>
    %169 = vector.multi_reduction <add>, %168, %cst_71 [0] : vector<32x32xf32> to vector<32xf32>
    %170 = vector.shape_cast %169 : vector<32xf32> to vector<1x32xf32>
    %171 = vector.broadcast %170 : vector<1x32xf32> to vector<32x32xf32>
    %172 = arith.divf %168, %171 : vector<32x32xf32>
    %cst_72 = arith.constant dense<0.000000e+00> : vector<32x12xf32>
    %173 = tpu.matmul %172, %130, %cst_72 {dimension_numbers = #tpu.dot_dimension_numbers<[1], [0], [0], [1], [0, 0, 1, 1], [], []>} : vector<32x32xf32>, vector<32x12xf32>, vector<32x12xf32> -> vector<32x12xf32>
    %cst_73 = arith.constant 1.000000e-01 : f32
    %174 = vector.broadcast %cst_73 : f32 to vector<32x12xf32>
    %175 = arith.mulf %174, %173 : vector<32x12xf32>
    %cst_74 = arith.constant 0.899999976 : f32
    %176 = vector.broadcast %cst_74 : f32 to vector<32x12xf32>
    %177 = arith.mulf %176, %130 : vector<32x12xf32>
    %178 = arith.addf %175, %177 : vector<32x12xf32>
    %179 = vector.broadcast %100 : vector<32x1xf32> to vector<32x12xf32>
    %180 = arith.mulf %178, %179 : vector<32x12xf32>
    %181 = vector.broadcast %101 : vector<32x1xf32> to vector<32x12xf32>
    %182 = arith.addf %180, %181 : vector<32x12xf32>
    %cst_75 = arith.constant dense<0.000000e+00> : vector<32x32xf32>
    %183 = tpu.matmul %159, %130, %cst_75 {dimension_numbers = #tpu.dot_dimension_numbers<[1], [1], [0], [0], [0, 0, 1, 0], [], []>} : vector<32x12xf32>, vector<32x12xf32>, vector<32x32xf32> -> vector<32x32xf32>
    %cst_76 = arith.constant 2.000000e-01 : f32
    %184 = vector.broadcast %cst_76 : f32 to vector<32x32xf32>
    %185 = arith.mulf %184, %183 : vector<32x32xf32>
    %186 = arith.maximumf %183, %185 : vector<32x32xf32>
    %cst_77 = arith.constant dense<0xFF800000> : vector<32xf32>
    %187 = vector.multi_reduction <maximumf>, %186, %cst_77 [0] : vector<32x32xf32> to vector<32xf32>
    %188 = vector.shape_cast %187 : vector<32xf32> to vector<1x32xf32>
    %189 = vector.broadcast %188 : vector<1x32xf32> to vector<32x32xf32>
    %190 = arith.subf %186, %189 : vector<32x32xf32>
    %191 = math.exp %190 : vector<32x32xf32>
    %cst_78 = arith.constant dense<0.000000e+00> : vector<32xf32>
    %192 = vector.multi_reduction <add>, %191, %cst_78 [0] : vector<32x32xf32> to vector<32xf32>
    %193 = vector.shape_cast %192 : vector<32xf32> to vector<1x32xf32>
    %194 = vector.broadcast %193 : vector<1x32xf32> to vector<32x32xf32>
    %195 = arith.divf %191, %194 : vector<32x32xf32>
    %cst_79 = arith.constant dense<0.000000e+00> : vector<32x12xf32>
    %196 = tpu.matmul %195, %159, %cst_79 {dimension_numbers = #tpu.dot_dimension_numbers<[1], [0], [0], [1], [0, 0, 1, 1], [], []>} : vector<32x32xf32>, vector<32x12xf32>, vector<32x12xf32> -> vector<32x12xf32>
    %cst_80 = arith.constant 1.000000e-01 : f32
    %197 = vector.broadcast %cst_80 : f32 to vector<32x12xf32>
    %198 = arith.mulf %197, %196 : vector<32x12xf32>
    %cst_81 = arith.constant 0.899999976 : f32
    %199 = vector.broadcast %cst_81 : f32 to vector<32x12xf32>
    %200 = arith.mulf %199, %159 : vector<32x12xf32>
    %201 = arith.addf %198, %200 : vector<32x12xf32>
    %202 = vector.broadcast %100 : vector<32x1xf32> to vector<32x12xf32>
    %203 = arith.mulf %201, %202 : vector<32x12xf32>
    %204 = vector.broadcast %101 : vector<32x1xf32> to vector<32x12xf32>
    %205 = arith.addf %203, %204 : vector<32x12xf32>
    %cst_82 = arith.constant dense<0.000000e+00> : vector<32x6xf32>
    %206 = tpu.matmul %182, %30, %cst_82 {dimension_numbers = #tpu.dot_dimension_numbers<[1], [0], [0], [1], [0, 0, 1, 1], [], []>} : vector<32x12xf32>, vector<12x6xf32>, vector<32x6xf32> -> vector<32x6xf32>
    %cst_83 = arith.constant dense<0.000000e+00> : vector<32x6xf32>
    %207 = tpu.matmul %182, %37, %cst_83 {dimension_numbers = #tpu.dot_dimension_numbers<[1], [0], [0], [1], [0, 0, 1, 1], [], []>} : vector<32x12xf32>, vector<12x6xf32>, vector<32x6xf32> -> vector<32x6xf32>
    %208 = arith.maximumf %206, %207 : vector<32x6xf32>
    %cst_84 = arith.constant 0.000000e+00 : f32
    %209 = vector.broadcast %cst_84 : f32 to vector<32x6xf32>
    %210 = arith.maximumf %208, %209 : vector<32x6xf32>
    %cst_85 = arith.constant dense<0.000000e+00> : vector<32x6xf32>
    %211 = tpu.matmul %205, %30, %cst_85 {dimension_numbers = #tpu.dot_dimension_numbers<[1], [0], [0], [1], [0, 0, 1, 1], [], []>} : vector<32x12xf32>, vector<12x6xf32>, vector<32x6xf32> -> vector<32x6xf32>
    %cst_86 = arith.constant dense<0.000000e+00> : vector<32x6xf32>
    %212 = tpu.matmul %205, %37, %cst_86 {dimension_numbers = #tpu.dot_dimension_numbers<[1], [0], [0], [1], [0, 0, 1, 1], [], []>} : vector<32x12xf32>, vector<12x6xf32>, vector<32x6xf32> -> vector<32x6xf32>
    %213 = arith.maximumf %211, %212 : vector<32x6xf32>
    %cst_87 = arith.constant 0.000000e+00 : f32
    %214 = vector.broadcast %cst_87 : f32 to vector<32x6xf32>
    %215 = arith.maximumf %213, %214 : vector<32x6xf32>
    %216 = tpu.concatenate %210, %215 in 1 : vector<32x6xf32>, vector<32x6xf32> -> vector<32x12xf32>
    %c0_88 = arith.constant 0 : index
    %c0_89 = arith.constant 0 : index
    %c0_90 = arith.constant 0 : index
    %217 = vector.load %arg6[%c0_88, %c0_89, %c0_90] : memref<1x32x12xf32, #tpu.memory_space<vmem>>, vector<1x32x12xf32>
    %218 = vector.shape_cast %217 : vector<1x32x12xf32> to vector<32x12xf32>
    %219 = vector.shape_cast %216 : vector<32x12xf32> to vector<1x32x12xf32>
    tpu.vector_store %arg6[%c0_88, %c0_89, %c0_90], %219 {strides = array<i32>} : memref<1x32x12xf32, #tpu.memory_space<vmem>>, vector<1x32x12xf32>,
    return
  }
  func.func @transform_0(%arg0: i32) -> (i32, i32, i32) {
    %c0_i32 = arith.constant 0 : i32
    %c0_i32_0 = arith.constant 0 : i32
    %c0_i32_1 = arith.constant 0 : i32
    return %arg0, %c0_i32, %c0_i32_0 : i32, i32, i32
  }
  func.func @transform_1(%arg0: i32) -> (i32, i32) {
    %c0_i32 = arith.constant 0 : i32
    %c0_i32_0 = arith.constant 0 : i32
    %c0_i32_1 = arith.constant 0 : i32
    return %c0_i32, %c0_i32_0 : i32, i32
  }
  func.func @transform_2(%arg0: i32) -> (i32, i32) {
    %c0_i32 = arith.constant 0 : i32
    %c0_i32_0 = arith.constant 0 : i32
    %c0_i32_1 = arith.constant 0 : i32
    return %c0_i32, %c0_i32_0 : i32, i32
  }
  func.func @transform_3(%arg0: i32) -> (i32, i32, i32) {
    %c0_i32 = arith.constant 0 : i32
    %c0_i32_0 = arith.constant 0 : i32
    %c0_i32_1 = arith.constant 0 : i32
    %c0_i32_2 = arith.constant 0 : i32
    return %c0_i32, %c0_i32_0, %c0_i32_1 : i32, i32, i32
  }
  func.func @transform_4(%arg0: i32) -> (i32, i32) {
    %c0_i32 = arith.constant 0 : i32
    %c0_i32_0 = arith.constant 0 : i32
    %c0_i32_1 = arith.constant 0 : i32
    return %c0_i32, %c0_i32_0 : i32, i32
  }
  func.func @transform_5(%arg0: i32) -> (i32, i32, i32) {
    %c0_i32 = arith.constant 0 : i32
    %c0_i32_0 = arith.constant 0 : i32
    %c0_i32_1 = arith.constant 0 : i32
    return %arg0, %c0_i32, %c0_i32_0 : i32, i32, i32
  }
}

</mosaic_0001>

<llo_original>
// kernel: appnp_forward.1
$region0: #{appnp_forward.1}
  #allocation0 [shape = 'u32[]', space=smem, size = 0x4, offset = 0x4, fixed_abs, tag = 'smem constant byte address 0x4 - core index']
  #allocation1 [shape = 'u32[72,128]{1,0:T(1,128)}', space=vmem, size = 0x9000, scoped, tag = 'internal scratch']
  %s0 = inlined_call_operand.vmem [shape: f32[2,50,275], index: 0, kind: input, shape index: {}]
  %s1 = inlined_call_operand.vmem [shape: f32[32,275], index: 1, kind: input, shape index: {}]
  %s2 = inlined_call_operand.vmem [shape: f32[32,3], index: 2, kind: input, shape index: {}]
  %s3 = inlined_call_operand.vmem [shape: f32[5,32,32], index: 3, kind: input, shape index: {}]
  %s4 = inlined_call_operand.vmem [shape: f32[32,3], index: 4, kind: input, shape index: {}]
  %s5 = inlined_call_operand.vmem [shape: f32[2,32,12], index: 5, kind: output, shape index: {}]
  %s6 = sld [smem:[#allocation0]]
  $region53: #{appnp_forward.1} parent=0
    _
  %s8 = ssub.s32 1, %s6
  %s9 = scalar_select 0, %s8, %s6
  loop: start=0, step=1, limit=4
  $region2: #{appnp_forward.1} parent=0 // loop_pre_header
    _
  $region3: #{appnp_forward.1} parent=0 // loop_header
    %s11 = sphi 0, %s15
    %p12 = scmp.ge.s32.totalorder %s11, 4
    %s21 = sphi 0, %s23
    %s24 = sphi 0, %s21
    %s25 = sphi 0, %s24
    %s41 = sphi 0, %s25
    %s45 = sphi 0, %s45
    %s47 = sphi 0, %s45
    %s48 = sphi 0, %s47
    %s62 = sphi 0, %s48
    %s66 = sphi 0, %s66
    %s68 = sphi 0, %s66
    %s69 = sphi 0, %s68
    %s83 = sphi 0, %s69
    %s87 = sphi 0, %s87
    %s89 = sphi 0, %s87
    %s90 = sphi 0, %s89
    %s104 = sphi 0, %s90
    %s108 = sphi 0, %s108
    %s110 = sphi 0, %s108
    %s111 = sphi 0, %s110
    %s125 = sphi 0, %s111
    %s131 = sphi 0, %s133
    %s134 = sphi 0, %s131
    %s135 = sphi 0, %s134
    %s151 = sphi 0, %s135
  $region4: #{appnp_forward.1} parent=0 // loop_header_branch
    %14 = sbr.rel (%p12) target = $region8
  $region5: #{appnp_forward.1} parent=0 // loop_body
    %s16 = ssub.s32 %s11, 1
    %s17 = ssub.s32 %s11, 2
    %s18 = sadd.s32 %s11, 1
    %s19 = ssub.s32 %s11, %s18
    %p20 = scmp.eq.s32.totalorder %s19, 0
    %s22 = sadd.s32 %s21, 1
    %s23 = scalar_select %p20, %s21, %s22
    %p26 = pneg %p20
    %p27 = scmp.eq.s32.totalorder %s11, 1
    %p28 = por %p26, %p27
    %p29 = scmp.ne.s32.totalorder %s21, %s24
    %p30 = scmp.eq.s32.totalorder %s11, 0
    %p31 = por %p29, %p30
    %p32 = scmp.ne.s32.totalorder %s21, %s24
    %p33 = scmp.eq.s32.totalorder %s16, 1
    %p34 = por %p32, %p33
    %p35 = scmp.ne.s32.totalorder %s24, %s25
    %p36 = scmp.eq.s32.totalorder %s16, 0
    %p37 = por %p35, %p36
    %p38 = scmp.ne.s32.totalorder %s24, %s25
    %p39 = scmp.eq.s32.totalorder %s17, 1
    %p40 = por %p38, %p39
    %p42 = scmp.ne.s32.totalorder %s25, %s41
    %p43 = scmp.eq.s32.totalorder %s17, 0
    %p44 = por %p42, %p43
    %s46 = sadd.s32 %s45, 1
    %p49 = scmp.eq.s32.totalorder %s11, 1
    %p50 = scmp.ne.s32.totalorder %s45, %s47
    %p51 = scmp.eq.s32.totalorder %s11, 0
    %p52 = por %p50, %p51
    %p53 = scmp.ne.s32.totalorder %s45, %s47
    %p54 = scmp.eq.s32.totalorder %s16, 1
    %p55 = por %p53, %p54
    %p56 = scmp.ne.s32.totalorder %s47, %s48
    %p57 = scmp.eq.s32.totalorder %s16, 0
    %p58 = por %p56, %p57
    %p59 = scmp.ne.s32.totalorder %s47, %s48
    %p60 = scmp.eq.s32.totalorder %s17, 1
    %p61 = por %p59, %p60
    %p63 = scmp.ne.s32.totalorder %s48, %s62
    %p64 = scmp.eq.s32.totalorder %s17, 0
    %p65 = por %p63, %p64
    %s67 = sadd.s32 %s66, 1
    %p70 = scmp.eq.s32.totalorder %s11, 1
    %p71 = scmp.ne.s32.totalorder %s66, %s68
    %p72 = scmp.eq.s32.totalorder %s11, 0
    %p73 = por %p71, %p72
    %p74 = scmp.ne.s32.totalorder %s66, %s68
    %p75 = scmp.eq.s32.totalorder %s16, 1
    %p76 = por %p74, %p75
    %p77 = scmp.ne.s32.totalorder %s68, %s69
    %p78 = scmp.eq.s32.totalorder %s16, 0
    %p79 = por %p77, %p78
    %p80 = scmp.ne.s32.totalorder %s68, %s69
    %p81 = scmp.eq.s32.totalorder %s17, 1
    %p82 = por %p80, %p81
    %p84 = scmp.ne.s32.totalorder %s69, %s83
    %p85 = scmp.eq.s32.totalorder %s17, 0
    %p86 = por %p84, %p85
    %s88 = sadd.s32 %s87, 1
    %p91 = scmp.eq.s32.totalorder %s11, 1
    %p92 = scmp.ne.s32.totalorder %s87, %s89
    %p93 = scmp.eq.s32.totalorder %s11, 0
    %p94 = por %p92, %p93
    %p95 = scmp.ne.s32.totalorder %s87, %s89
    %p96 = scmp.eq.s32.totalorder %s16, 1
    %p97 = por %p95, %p96
    %p98 = scmp.ne.s32.totalorder %s89, %s90
    %p99 = scmp.eq.s32.totalorder %s16, 0
    %p100 = por %p98, %p99
    %p101 = scmp.ne.s32.totalorder %s89, %s90
    %p102 = scmp.eq.s32.totalorder %s17, 1
    %p103 = por %p101, %p102
    %p105 = scmp.ne.s32.totalorder %s90, %s104
    %p106 = scmp.eq.s32.totalorder %s17, 0
    %p107 = por %p105, %p106
    %s109 = sadd.s32 %s108, 1
    %p112 = scmp.eq.s32.totalorder %s11, 1
    %p113 = scmp.ne.s32.totalorder %s108, %s110
    %p114 = scmp.eq.s32.totalorder %s11, 0
    %p115 = por %p113, %p114
    %p116 = scmp.ne.s32.totalorder %s108, %s110
    %p117 = scmp.eq.s32.totalorder %s16, 1
    %p118 = por %p116, %p117
    %p119 = scmp.ne.s32.totalorder %s110, %s111
    %p120 = scmp.eq.s32.totalorder %s16, 0
    %p121 = por %p119, %p120
    %p122 = scmp.ne.s32.totalorder %s110, %s111
    %p123 = scmp.eq.s32.totalorder %s17, 1
    %p124 = por %p122, %p123
    %p126 = scmp.ne.s32.totalorder %s111, %s125
    %p127 = scmp.eq.s32.totalorder %s17, 0
    %p128 = por %p126, %p127
    %s129 = ssub.s32 %s11, %s18
    %p130 = scmp.eq.s32.totalorder %s129, 0
    %s132 = sadd.s32 %s131, 1
    %s133 = scalar_select %p130, %s131, %s132
    %p136 = pneg %p130
    %p137 = scmp.eq.s32.totalorder %s11, 1
    %p138 = por %p136, %p137
    %p139 = scmp.ne.s32.totalorder %s131, %s134
    %p140 = scmp.eq.s32.totalorder %s11, 0
    %p141 = por %p139, %p140
    %p142 = scmp.ne.s32.totalorder %s131, %s134
    %p143 = scmp.eq.s32.totalorder %s16, 1
    %p144 = por %p142, %p143
    %p145 = scmp.ne.s32.totalorder %s134, %s135
    %p146 = scmp.eq.s32.totalorder %s16, 0
    %p147 = por %p145, %p146
    %p148 = scmp.ne.s32.totalorder %s134, %s135
    %p149 = scmp.eq.s32.totalorder %s17, 1
    %p150 = por %p148, %p149
    %p152 = scmp.ne.s32.totalorder %s135, %s151
    %p153 = scmp.eq.s32.totalorder %s17, 0
    %p154 = por %p152, %p153
    %p155 = scmp.le.s32.totalorder 1, %s11
    %p156 = scmp.lt.s32.totalorder %s11, 3
    %p157 = pnand %p155, %p156
    %p158 = pneg %p157
    // Predicated region
    $region9: #{appnp_forward.1} parent=5 // pred_check
      _
    $region10: #{appnp_forward.1} parent=5 // pred_check_branch
      %160 = sbr.rel (%p157) target = $region12
    $region11: #{appnp_forward.1} parent=5 // pred_region
      %s161 = ssub.s32 %s11, 1
      // Predicated region
      $region13: #{appnp_forward.1} parent=11 // pred_check
        %p162 = pneg %p58
      $region14: #{appnp_forward.1} parent=11 // pred_check_branch
        %164 = sbr.rel (%p162) target = $region16
      $region15: #{appnp_forward.1} parent=11 // pred_region
        _
      $region16: #{appnp_forward.1} parent=11 // pred_fallthru
        _
      // Predicated region
      $region17: #{appnp_forward.1} parent=11 // pred_check
        %p165 = pneg %p79
      $region18: #{appnp_forward.1} parent=11 // pred_check_branch
        %167 = sbr.rel (%p165) target = $region20
      $region19: #{appnp_forward.1} parent=11 // pred_region
        _
      $region20: #{appnp_forward.1} parent=11 // pred_fallthru
        _
      // Predicated region
      $region21: #{appnp_forward.1} parent=11 // pred_check
        %p168 = pneg %p100
      $region22: #{appnp_forward.1} parent=11 // pred_check_branch
        %170 = sbr.rel (%p168) target = $region24
      $region23: #{appnp_forward.1} parent=11 // pred_region
        _
      $region24: #{appnp_forward.1} parent=11 // pred_fallthru
        _
      // Predicated region
      $region25: #{appnp_forward.1} parent=11 // pred_check
        %p171 = pneg %p121
      $region26: #{appnp_forward.1} parent=11 // pred_check_branch
        %173 = sbr.rel (%p171) target = $region28
      $region27: #{appnp_forward.1} parent=11 // pred_region
        _
      $region28: #{appnp_forward.1} parent=11 // pred_fallthru
        _
    $region12: #{appnp_forward.1} parent=5 // pred_fallthru
      _
    %p174 = scmp.lt.s32.totalorder %s11, 2
    // Predicated region
    $region29: #{appnp_forward.1} parent=5 // pred_check
      %p175 = pneg %p174
    $region30: #{appnp_forward.1} parent=5 // pred_check_branch
      %177 = sbr.rel (%p175) target = $region32
    $region31: #{appnp_forward.1} parent=5 // pred_region
      // Predicated region
      $region33: #{appnp_forward.1} parent=31 // pred_check
        %p178 = pneg %p31
      $region34: #{appnp_forward.1} parent=31 // pred_check_branch
        %180 = sbr.rel (%p178) target = $region36
      $region35: #{appnp_forward.1} parent=31 // pred_region
        %p181 = scmp.lt.s32.totalorder %s11, 1
        %s182 = scalar_select %p181, %s11, 1
        %s183 = smul.addr %s182, 21
        %s184 = smul.addr %s183, 8
        %s185 = scalar_lea.vmem %s0, %s184
      $region36: #{appnp_forward.1} parent=31 // pred_fallthru
        _
    $region32: #{appnp_forward.1} parent=5 // pred_fallthru
      _
    %p186 = scmp.le.s32.totalorder 1, %s11
    %p187 = scmp.lt.s32.totalorder %s11, 3
    %p188 = pnand %p186, %p187
    %p189 = pneg %p188
    // Predicated region
    $region37: #{appnp_forward.1} parent=5 // pred_check
      _
    $region38: #{appnp_forward.1} parent=5 // pred_check_branch
      %191 = sbr.rel (%p188) target = $region40
    $region39: #{appnp_forward.1} parent=5 // pred_region
      %s192 = ssub.s32 %s11, 1
      %p193 = scmp.lt.s32.totalorder %s16, 1
      %s194 = scalar_select %p193, %s16, 1
      %s195 = smul.addr %s194, 21
      %s196 = smul.addr %s195, 8
      %s197 = scalar_lea.vmem %s0, %s196
      %p198 = pneg %p37
      %p199 = pneg %p34
      %p200 = pneg %p58
      %p201 = pneg %p55
      %p202 = pneg %p79
      %p203 = pneg %p76
      %p204 = pneg %p100
      %p205 = pneg %p97
      %p206 = pneg %p121
      %p207 = pneg %p118
      %p208 = pneg %p147
      %p209 = pneg %p144
      %p210 = scmp.lt.s32.totalorder %s16, 1
      %s211 = scalar_select %p210, %s16, 1
      %s212 = smul.addr %s211, 4
      %s213 = smul.addr %s212, 8
      %s214 = scalar_lea.vmem %s5, %s213
      %p215 = scmp.lt.s32.totalorder %s16, 1
      %s216 = scalar_select %p215, %s16, 1
      %s217 = smul.addr %s216, 21
      %s218 = smul.addr %s217, 8
      %s219 = scalar_lea.vmem %s0, %s218
      %p220 = scmp.lt.s32.totalorder %s16, 1
      %s221 = scalar_select %p220, %s16, 1
      %s222 = smul.addr %s221, 4
      %s223 = smul.addr %s222, 8
      %s224 = scalar_lea.vmem %s5, %s223
      %v225 = vld [vmem:[%s2] sm:$0xff]
      %v226 = vld [vmem:[%s2 + $0x8] sm:$0xff]
      %v227 = vld [vmem:[%s2 + $0x10] sm:$0xff]
      %v228 = vld [vmem:[%s2 + $0x18] sm:$0xff]
      %v229 = vld [vmem:[%s1] sm:$0xff]
      %v230 = vld [vmem:[%s1 + $0x8] sm:$0xff]
      %v231 = vld [vmem:[%s1 + $0x10] sm:$0xff]
      %v232 = vld [vmem:[%s1 + $0x18] sm:$0xff]
      %v233 = vld [vmem:[%s1 + $0x20] sm:$0xff]
      %v234 = vld [vmem:[%s1 + $0x28] sm:$0xff]
      %v235 = vld [vmem:[%s1 + $0x30] sm:$0xff]
      %v236 = vld [vmem:[%s1 + $0x38] sm:$0xff]
      %v237 = vld [vmem:[%s1 + $0x40] sm:$0xff]
      %v238 = vld [vmem:[%s1 + $0x48] sm:$0xff]
      %v239 = vld [vmem:[%s1 + $0x50] sm:$0xff]
      %v240 = vld [vmem:[%s1 + $0x58] sm:$0xff]
      %v241 = vld [vmem:[%s219] sm:$0xff]
      %v242 = vld [vmem:[%s219 + $0x8] sm:$0xff]
      %v243 = vld [vmem:[%s219 + $0x10] sm:$0xff]
      %v244 = vld [vmem:[%s219 + $0x18] sm:$0xff]
      %v245 = vld [vmem:[%s219 + $0x20] sm:$0xff]
      %v246 = vld [vmem:[%s219 + $0x28] sm:$0xff]
      %v247 = vld [vmem:[%s219 + $0x30] sm:$0xff]
      %v248 = vld [vmem:[%s219 + $0x38] sm:$0xff]
      %v249 = vld [vmem:[%s219 + $0x40] sm:$0xff]
      %v250 = vld [vmem:[%s219 + $0x48] sm:$0xff]
      %v251 = vld [vmem:[%s219 + $0x50] sm:$0xff]
      %v252 = vld [vmem:[%s219 + $0x58] sm:$0xff]
      %v253 = vld [vmem:[%s219 + $0x60] sm:$0xff]
      %v254 = vld [vmem:[%s219 + $0x68] sm:$0xff]
      %v255 = vld [vmem:[%s219 + $0x70] sm:$0xff]
      %v256 = vld [vmem:[%s219 + $0x78] sm:$0xff]
      %v257 = vld [vmem:[%s219 + $0x80] sm:$0xff]
      %v258 = vld [vmem:[%s219 + $0x88] sm:$0xff]
      %v259 = vld [vmem:[%s219 + $0x90] sm:$0x3]
      %v260 = vld [vmem:[%s219 + $0x98] sm:$0x3]
      %v261 = vld [vmem:[%s219 + $0xa0] sm:$0x3]
      %263 = vset.pattern.permute.xlu0 0
      %264 = vperm.xlu0 %263, %v225
      %v265 = vpop.permute.xlu0 %264
      %268 = vset.pattern.permute.xlu0 0
      %269 = vperm.xlu0 %268, %v226
      %v270 = vpop.permute.xlu0 %269
      %273 = vset.pattern.permute.xlu0 0
      %274 = vperm.xlu0 %273, %v227
      %v275 = vpop.permute.xlu0 %274
      %278 = vset.pattern.permute.xlu0 0
      %279 = vperm.xlu0 %278, %v228
      %v280 = vpop.permute.xlu0 %279
      %vm282 = vcmask 154624
      %v284 = vsel %vm282, %v231, 0
      %v287 = vsel %vm282, %v234, 0
      %v290 = vsel %vm282, %v237, 0
      %v293 = vsel %vm282, %v240, 0
      %v296 = vsel %vm282, %v243, 0
      %v299 = vsel %vm282, %v246, 0
      %v302 = vsel %vm282, %v249, 0
      %v305 = vsel %vm282, %v252, 0
      %v308 = vsel %vm282, %v255, 0
      %v311 = vsel %vm282, %v258, 0
      %v314 = vsel %vm282, %v261, 0
      %316 = vmatpush.xpose.msra.mxu0 0.0
      %317 = vmatpush.xpose.msra.mxu0 0.0
      %318 = vmatpush.xpose.msra.mxu0 0.0
      %319 = vmatpush.xpose.msra.mxu0 0.0
      %320 = vmatpush.xpose.msra.mxu0 0.0
      %321 = vmatpush.xpose.msra.mxu0 0.0
      %322 = vmatpush.xpose.msra.mxu0 0.0
      %323 = vmatpush.xpose.msra.mxu0 0.0
      %324 = vmatpush.xpose.msra.mxu0 0.0
      %325 = vmatpush.xpose.msra.mxu0 %v259
      %326 = vmatpush.xpose.msra.mxu0 %v256
      %327 = vmatpush.xpose.msra.mxu0 %v253
      %328 = vmatpush.xpose.msra.mxu0 %v250
      %329 = vmatpush.xpose.msra.mxu0 %v247
      %330 = vmatpush.xpose.msra.mxu0 %v244
      %331 = vmatpush.xpose.msra.mxu0 %v241
      %332 = vmatmul.f32.gmra.mxu0 %v229
      %v333 = vpop.f32.mrf.mxu0
      %v334 = vadd.f32 %v265, %v333
      %335 = vmatmul.f32.gmra.mxu0 %v232
      %v336 = vpop.f32.mrf.mxu0
      %v337 = vadd.f32 %v270, %v336
      %338 = vmatmul.f32.gmra.mxu0 %v235
      %v339 = vpop.f32.mrf.mxu0
      %v340 = vadd.f32 %v275, %v339
      %341 = vmatmul.f32.gmra.mxu0 %v238
      %v342 = vpop.f32.mrf.mxu0
      %v343 = vadd.f32 %v280, %v342
      %344 = vdwg.mxu0
      %345 = vmatpush.xpose.msra.mxu0 0.0
      %346 = vmatpush.xpose.msra.mxu0 0.0
      %347 = vmatpush.xpose.msra.mxu0 0.0
      %348 = vmatpush.xpose.msra.mxu0 0.0
      %349 = vmatpush.xpose.msra.mxu0 0.0
      %350 = vmatpush.xpose.msra.mxu0 0.0
      %351 = vmatpush.xpose.msra.mxu0 0.0
      %352 = vmatpush.xpose.msra.mxu0 0.0
      %353 = vmatpush.xpose.msra.mxu0 0.0
      %354 = vmatpush.xpose.msra.mxu0 %v260
      %355 = vmatpush.xpose.msra.mxu0 %v257
      %356 = vmatpush.xpose.msra.mxu0 %v254
      %357 = vmatpush.xpose.msra.mxu0 %v251
      %358 = vmatpush.xpose.msra.mxu0 %v248
      %359 = vmatpush.xpose.msra.mxu0 %v245
      %360 = vmatpush.xpose.msra.mxu0 %v242
      %361 = vmatmul.f32.gmra.mxu0 %v230
      %v362 = vpop.f32.mrf.mxu0
      %v363 = vadd.f32 %v334, %v362
      %364 = vmatmul.f32.gmra.mxu0 %v233
      %v365 = vpop.f32.mrf.mxu0
      %v366 = vadd.f32 %v337, %v365
      %367 = vmatmul.f32.gmra.mxu0 %v236
      %v368 = vpop.f32.mrf.mxu0
      %v369 = vadd.f32 %v340, %v368
      %370 = vmatmul.f32.gmra.mxu0 %v239
      %v371 = vpop.f32.mrf.mxu0
      %v372 = vadd.f32 %v343, %v371
      %373 = vdwg.mxu0
      %374 = vmatpush.xpose.msra.mxu0 0.0
      %375 = vmatpush.xpose.msra.mxu0 0.0
      %376 = vmatpush.xpose.msra.mxu0 0.0
      %377 = vmatpush.xpose.msra.mxu0 0.0
      %378 = vmatpush.xpose.msra.mxu0 0.0
      %379 = vmatpush.xpose.msra.mxu0 0.0
      %380 = vmatpush.xpose.msra.mxu0 0.0
      %381 = vmatpush.xpose.msra.mxu0 0.0
      %382 = vmatpush.xpose.msra.mxu0 0.0
      %383 = vmatpush.xpose.msra.mxu0 %v314
      %384 = vmatpush.xpose.msra.mxu0 %v311
      %385 = vmatpush.xpose.msra.mxu0 %v308
      %386 = vmatpush.xpose.msra.mxu0 %v305
      %387 = vmatpush.xpose.msra.mxu0 %v302
      %388 = vmatpush.xpose.msra.mxu0 %v299
      %389 = vmatpush.xpose.msra.mxu0 %v296
      %390 = vmatmul.f32.gmra.mxu0 %v284
      %v391 = vpop.f32.mrf.mxu0
      %v392 = vadd.f32 %v363, %v391
      %393 = vmatmul.f32.gmra.mxu0 %v287
      %v394 = vpop.f32.mrf.mxu0
      %v395 = vadd.f32 %v366, %v394
      %396 = vmatmul.f32.gmra.mxu0 %v290
      %v397 = vpop.f32.mrf.mxu0
      %v398 = vadd.f32 %v369, %v397
      %399 = vmatmul.f32.gmra.mxu0 %v293
      %v400 = vpop.f32.mrf.mxu0
      %v401 = vadd.f32 %v372, %v400
      %402 = vdwg.mxu0
      %v403 = vlaneseq
      %v404 = vshrl.u32 %v403, 7
      %v405 = vadd.s32 %v404, 8
      %v406 = vadd.s32 %v404, 16
      %v407 = vlaneseq
      %v408 = vand.u32 %v407, 127
      %v409 = vmul.u32 %v408, 2
      %vm410 = vcmp.eq.s32.totalorder %v404, %v409
      %vm411 = vcmp.eq.s32.totalorder %v405, %v409
      %vm412 = vcmp.eq.s32.totalorder %v406, %v409
      %v413 = vsel %vm410, 1, 0
      %v414 = vsel %vm411, 1, 0
      %v415 = vsel %vm412, 1, 0
      %v416 = vcvt.s32.f32 %v413
      %v417 = vcvt.s32.f32 %v414
      %v418 = vcvt.s32.f32 %v415
      %v419 = vadd.s32 %v409, 1
      %vm420 = vcmp.eq.s32.totalorder %v404, %v419
      %vm421 = vcmp.eq.s32.totalorder %v405, %v419
      %vm422 = vcmp.eq.s32.totalorder %v406, %v419
      %v423 = vsel %vm420, 1, 0
      %v424 = vsel %vm421, 1, 0
      %v425 = vsel %vm422, 1, 0
      %v426 = vcvt.s32.f32 %v423
      %v427 = vcvt.s32.f32 %v424
      %v428 = vcvt.s32.f32 %v425
      %vm429 = vcmask 203776
      %v431 = vsel %vm429, %v392, 0
      %v434 = vsel %vm429, %v395, 0
      %v437 = vsel %vm429, %v398, 0
      %v440 = vsel %vm429, %v401, 0
      %442 = vmatpush.xpose.msra.mxu0 0.0
      %443 = vmatpush.xpose.msra.mxu0 0.0
      %444 = vmatpush.xpose.msra.mxu0 0.0
      %445 = vmatpush.xpose.msra.mxu0 0.0
      %446 = vmatpush.xpose.msra.mxu0 0.0
      %447 = vmatpush.xpose.msra.mxu0 0.0
      %448 = vmatpush.xpose.msra.mxu0 0.0
      %449 = vmatpush.xpose.msra.mxu0 0.0
      %450 = vmatpush.xpose.msra.mxu0 0.0
      %451 = vmatpush.xpose.msra.mxu0 0.0
      %452 = vmatpush.xpose.msra.mxu0 0.0
      %453 = vmatpush.xpose.msra.mxu0 0.0
      %454 = vmatpush.xpose.msra.mxu0 %v440
      %455 = vmatpush.xpose.msra.mxu0 %v437
      %456 = vmatpush.xpose.msra.mxu0 %v434
      %457 = vmatpush.xpose.msra.mxu0 %v431
      %458 = vmatmul.f32.gmra.mxu0 %v431
      %v459 = vpop.f32.mrf.mxu0
      %v460 = vadd.f32 0.0, %v459
      %461 = vmatmul.f32.gmra.mxu0 %v434
      %v462 = vpop.f32.mrf.mxu0
      %v463 = vadd.f32 0.0, %v462
      %464 = vmatmul.f32.gmra.mxu0 %v437
      %v465 = vpop.f32.mrf.mxu0
      %v466 = vadd.f32 0.0, %v465
      %467 = vmatmul.f32.gmra.mxu0 %v440
      %v468 = vpop.f32.mrf.mxu0
      %v469 = vadd.f32 0.0, %v468
      %470 = vdwg.mxu0
      %v471 = vmul.f32 %v460, 0.2
      %v472 = vmul.f32 %v463, 0.2
      %v473 = vmul.f32 %v466, 0.2
      %v474 = vmul.f32 %v469, 0.2
      %v475 = vmax.f32 %v460, %v471
      %v476 = vmax.f32 %v463, %v472
      %v477 = vmax.f32 %v466, %v473
      %v478 = vmax.f32 %v469, %v474
      %vm479 = vcmask 261120
      %v480 = vsel %vm479, %v475, -inf
      %v481 = vsel %vm479, %v476, -inf
      %v482 = vsel %vm479, %v477, -inf
      %v483 = vsel %vm479, %v478, -inf
      %v484 = vmax.f32 %v480, %v481
      %v485 = vmax.f32 %v482, %v483
      %v486 = vmax.f32 %v484, %v485
      %v487 = vrot.slane %v486, 4
      %v488 = vmax.f32 %v486, %v487
      %v489 = vrot.slane %v488, 2
      %v490 = vmax.f32 %v488, %v489
      %v491 = vrot.slane %v490, 1
      %v492 = vmax.f32 %v490, %v491
      %v493 = vsub.f32 %v475, %v492
      %v494 = vsub.f32 %v476, %v492
      %v495 = vsub.f32 %v477, %v492
      %v496 = vsub.f32 %v478, %v492
      %v497 = vmul.f32 %v493, 1.442695
      %v498 = vpow.pop %v497
      %v499 = vmul.f32 %v494, 1.442695
      %v500 = vpow.pop %v499
      %v501 = vmul.f32 %v495, 1.442695
      %v502 = vpow.pop %v501
      %v503 = vmul.f32 %v496, 1.442695
      %v504 = vpow.pop %v503
      %v505 = vsel %vm479, %v498, 0.0
      %v506 = vsel %vm479, %v500, 0.0
      %v507 = vadd.f32 %v505, %v506
      %v508 = vsel %vm479, %v502, 0.0
      %v509 = vadd.f32 %v507, %v508
      %v510 = vsel %vm479, %v504, 0.0
      %v511 = vadd.f32 %v509, %v510
      %v512 = vrot.slane %v511, 4
      %v513 = vadd.f32 %v511, %v512
      %v514 = vrot.slane %v513, 2
      %v515 = vadd.f32 %v513, %v514
      %v516 = vrot.slane %v515, 1
      %v517 = vadd.f32 %v515, %v516
      %v518 = vrcp.pop %v517
      %v519 = vmul.f32 %v517, %v518
      %v520 = vsub.f32 1.0, %v519
      %v521 = vmul.f32 %v518, %v520
      %v522 = vadd.f32 %v518, %v521
      %vm523 = vweird.f32 %v517
      %vm524 = vweird.f32 %v518
      %vm525 = vmor %vm523, %vm524
      %v526 = vsel %vm525, %v518, %v522
      %v527 = vand.u32 2147483647, %v517
      %vm528 = vcmp.eq.f32.partialorder %v527, 8.507059e+37
      %v529 = vand.u32 %v517, 2147483648
      %v530 = vor.u32 1.1754944e-38, %v529
      %v531 = vsel %vm528, %v530, %v526
      %v532 = vmul.f32 %v498, %v531
      %v533 = vmul.f32 %v500, %v531
      %v534 = vmul.f32 %v502, %v531
      %v535 = vmul.f32 %v504, %v531
      %v537 = vsel %vm479, %v532, 0
      %v540 = vsel %vm479, %v533, 0
      %v543 = vsel %vm479, %v534, 0
      %v546 = vsel %vm479, %v535, 0
      %548 = vmatpush.msra.mxu0 0.0
      %549 = vmatpush.msra.mxu0 0.0
      %550 = vmatpush.msra.mxu0 0.0
      %551 = vmatpush.msra.mxu0 0.0
      %552 = vmatpush.msra.mxu0 0.0
      %553 = vmatpush.msra.mxu0 0.0
      %554 = vmatpush.msra.mxu0 0.0
      %555 = vmatpush.msra.mxu0 0.0
      %556 = vmatpush.msra.mxu0 0.0
      %557 = vmatpush.msra.mxu0 0.0
      %558 = vmatpush.msra.mxu0 0.0
      %559 = vmatpush.msra.mxu0 0.0
      %560 = vmatpush.msra.mxu0 %v401
      %561 = vmatpush.msra.mxu0 %v398
      %562 = vmatpush.msra.mxu0 %v395
      %563 = vmatpush.msra.mxu0 %v392
      %564 = vmatmul.f32.gmra.mxu0 %v537
      %v565 = vpop.f32.mrf.mxu0
      %v566 = vadd.f32 0.0, %v565
      %567 = vmatmul.f32.gmra.mxu0 %v540
      %v568 = vpop.f32.mrf.mxu0
      %v569 = vadd.f32 0.0, %v568
      %570 = vmatmul.f32.gmra.mxu0 %v543
      %v571 = vpop.f32.mrf.mxu0
      %v572 = vadd.f32 0.0, %v571
      %573 = vmatmul.f32.gmra.mxu0 %v546
      %v574 = vpop.f32.mrf.mxu0
      %v575 = vadd.f32 0.0, %v574
      %576 = vdwg.mxu0
      %v577 = vmul.f32 %v566, 0.1
      %v578 = vmul.f32 %v569, 0.1
      %v579 = vmul.f32 %v572, 0.1
      %v580 = vmul.f32 %v575, 0.1
      %v581 = vmul.f32 %v392, 0.9
      %v582 = vmul.f32 %v395, 0.9
      %v583 = vmul.f32 %v398, 0.9
      %v584 = vmul.f32 %v401, 0.9
      %v585 = vadd.f32 %v577, %v581
      %v586 = vadd.f32 %v578, %v582
      %v587 = vadd.f32 %v579, %v583
      %v588 = vadd.f32 %v580, %v584
      %589 = vset.pattern.permute.xlu0 1
      %590 = vperm.xlu0 %589, %v225
      %v591 = vpop.permute.xlu0 %590
      %593 = vset.pattern.permute.xlu0 1
      %594 = vperm.xlu0 %593, %v226
      %v595 = vpop.permute.xlu0 %594
      %597 = vset.pattern.permute.xlu0 1
      %598 = vperm.xlu0 %597, %v227
      %v599 = vpop.permute.xlu0 %598
      %601 = vset.pattern.permute.xlu0 1
      %602 = vperm.xlu0 %601, %v228
      %v603 = vpop.permute.xlu0 %602
      %v605 = vmul.f32 %v585, %v591
      %v606 = vmul.f32 %v586, %v595
      %v607 = vmul.f32 %v587, %v599
      %v608 = vmul.f32 %v588, %v603
      %609 = vset.pattern.permute.xlu0 2
      %610 = vperm.xlu0 %609, %v225
      %v611 = vpop.permute.xlu0 %610
      %613 = vset.pattern.permute.xlu0 2
      %614 = vperm.xlu0 %613, %v226
      %v615 = vpop.permute.xlu0 %614
      %617 = vset.pattern.permute.xlu0 2
      %618 = vperm.xlu0 %617, %v227
      %v619 = vpop.permute.xlu0 %618
      %621 = vset.pattern.permute.xlu0 2
      %622 = vperm.xlu0 %621, %v228
      %v623 = vpop.permute.xlu0 %622
      %v625 = vadd.f32 %v605, %v611
      %v626 = vadd.f32 %v606, %v615
      %v627 = vadd.f32 %v607, %v619
      %v628 = vadd.f32 %v608, %v623
      %vm629 = vcmask 195584
      %v631 = vsel %vm629, %v625, 0
      %v634 = vsel %vm629, %v626, 0
      %v637 = vsel %vm629, %v627, 0
      %v640 = vsel %vm629, %v628, 0
      %642 = vmatpush.msra.mxu0 0.0
      %643 = vmatpush.msra.mxu0 0.0
      %644 = vmatpush.msra.mxu0 0.0
      %645 = vmatpush.msra.mxu0 0.0
      %646 = vmatpush.msra.mxu0 0.0
      %647 = vmatpush.msra.mxu0 0.0
      %648 = vmatpush.msra.mxu0 0.0
      %649 = vmatpush.msra.mxu0 0.0
      %650 = vmatpush.msra.mxu0 0.0
      %651 = vmatpush.msra.mxu0 0.0
      %652 = vmatpush.msra.mxu0 0.0
      %653 = vmatpush.msra.mxu0 0.0
      %654 = vmatpush.msra.mxu0 0.0
      %655 = vmatpush.msra.mxu0 %v418
      %656 = vmatpush.msra.mxu0 %v417
      %657 = vmatpush.msra.mxu0 %v416
      %658 = vmatmul.f32.gmra.mxu0 %v631
      %v659 = vpop.f32.mrf.mxu0
      %v660 = vadd.f32 0.0, %v659
      %661 = vmatmul.f32.gmra.mxu0 %v634
      %v662 = vpop.f32.mrf.mxu0
      %v663 = vadd.f32 0.0, %v662
      %664 = vmatmul.f32.gmra.mxu0 %v637
      %v665 = vpop.f32.mrf.mxu0
      %v666 = vadd.f32 0.0, %v665
      %667 = vmatmul.f32.gmra.mxu0 %v640
      %v668 = vpop.f32.mrf.mxu0
      %v669 = vadd.f32 0.0, %v668
      %670 = vdwg.mxu0
      %671 = vmatpush.msra.mxu0 0.0
      %672 = vmatpush.msra.mxu0 0.0
      %673 = vmatpush.msra.mxu0 0.0
      %674 = vmatpush.msra.mxu0 0.0
      %675 = vmatpush.msra.mxu0 0.0
      %676 = vmatpush.msra.mxu0 0.0
      %677 = vmatpush.msra.mxu0 0.0
      %678 = vmatpush.msra.mxu0 0.0
      %679 = vmatpush.msra.mxu0 0.0
      %680 = vmatpush.msra.mxu0 0.0
      %681 = vmatpush.msra.mxu0 0.0
      %682 = vmatpush.msra.mxu0 0.0
      %683 = vmatpush.msra.mxu0 0.0
      %684 = vmatpush.msra.mxu0 %v428
      %685 = vmatpush.msra.mxu0 %v427
      %686 = vmatpush.msra.mxu0 %v426
      %687 = vmatmul.f32.gmra.mxu0 %v631
      %v688 = vpop.f32.mrf.mxu0
      %v689 = vadd.f32 0.0, %v688
      %690 = vmatmul.f32.gmra.mxu0 %v634
      %v691 = vpop.f32.mrf.mxu0
      %v692 = vadd.f32 0.0, %v691
      %693 = vmatmul.f32.gmra.mxu0 %v637
      %v694 = vpop.f32.mrf.mxu0
      %v695 = vadd.f32 0.0, %v694
      %696 = vmatmul.f32.gmra.mxu0 %v640
      %v697 = vpop.f32.mrf.mxu0
      %v698 = vadd.f32 0.0, %v697
      %699 = vdwg.mxu0
      %v700 = vmax.f32 %v660, %v689
      %v701 = vmax.f32 %v663, %v692
      %v702 = vmax.f32 %v666, %v695
      %v703 = vmax.f32 %v669, %v698
      %v704 = vmax.f32 %v700, 0.0
      %v705 = vmax.f32 %v701, 0.0
      %v706 = vmax.f32 %v702, 0.0
      %v707 = vmax.f32 %v703, 0.0
      %708 = vrot.lane.b32.xlu0 %v392, 103
      %v709 = vpop.permute.xlu0 %708
      %710 = vrot.lane.b32.xlu0 %v395, 103
      %v711 = vpop.permute.xlu0 %710
      %712 = vrot.lane.b32.xlu0 %v398, 103
      %v713 = vpop.permute.xlu0 %712
      %714 = vrot.lane.b32.xlu0 %v401, 103
      %v715 = vpop.permute.xlu0 %714
      %v716 = vsel %vm429, %v709, 0
      %v718 = vsel %vm429, %v711, 0
      %v720 = vsel %vm429, %v713, 0
      %v722 = vsel %vm429, %v715, 0
      %724 = vmatpush.xpose.msra.mxu0 0.0
      %725 = vmatpush.xpose.msra.mxu0 0.0
      %726 = vmatpush.xpose.msra.mxu0 0.0
      %727 = vmatpush.xpose.msra.mxu0 0.0
      %728 = vmatpush.xpose.msra.mxu0 0.0
      %729 = vmatpush.xpose.msra.mxu0 0.0
      %730 = vmatpush.xpose.msra.mxu0 0.0
      %731 = vmatpush.xpose.msra.mxu0 0.0
      %732 = vmatpush.xpose.msra.mxu0 0.0
      %733 = vmatpush.xpose.msra.mxu0 0.0
      %734 = vmatpush.xpose.msra.mxu0 0.0
      %735 = vmatpush.xpose.msra.mxu0 0.0
      %736 = vmatpush.xpose.msra.mxu0 %v722
      %737 = vmatpush.xpose.msra.mxu0 %v720
      %738 = vmatpush.xpose.msra.mxu0 %v718
      %739 = vmatpush.xpose.msra.mxu0 %v716
      %740 = vmatmul.f32.gmra.mxu0 %v716
      %v741 = vpop.f32.mrf.mxu0
      %v742 = vadd.f32 0.0, %v741
      %743 = vmatmul.f32.gmra.mxu0 %v718
      %v744 = vpop.f32.mrf.mxu0
      %v745 = vadd.f32 0.0, %v744
      %746 = vmatmul.f32.gmra.mxu0 %v720
      %v747 = vpop.f32.mrf.mxu0
      %v748 = vadd.f32 0.0, %v747
      %749 = vmatmul.f32.gmra.mxu0 %v722
      %v750 = vpop.f32.mrf.mxu0
      %v751 = vadd.f32 0.0, %v750
      %752 = vdwg.mxu0
      %v753 = vmul.f32 %v742, 0.2
      %v754 = vmul.f32 %v745, 0.2
      %v755 = vmul.f32 %v748, 0.2
      %v756 = vmul.f32 %v751, 0.2
      %v757 = vmax.f32 %v742, %v753
      %v758 = vmax.f32 %v745, %v754
      %v759 = vmax.f32 %v748, %v755
      %v760 = vmax.f32 %v751, %v756
      %v761 = vsel %vm479, %v757, -inf
      %v762 = vsel %vm479, %v758, -inf
      %v763 = vsel %vm479, %v759, -inf
      %v764 = vsel %vm479, %v760, -inf
      %v765 = vmax.f32 %v761, %v762
      %v766 = vmax.f32 %v763, %v764
      %v767 = vmax.f32 %v765, %v766
      %v768 = vrot.slane %v767, 4
      %v769 = vmax.f32 %v767, %v768
      %v770 = vrot.slane %v769, 2
      %v771 = vmax.f32 %v769, %v770
      %v772 = vrot.slane %v771, 1
      %v773 = vmax.f32 %v771, %v772
      %v774 = vsub.f32 %v757, %v773
      %v775 = vsub.f32 %v758, %v773
      %v776 = vsub.f32 %v759, %v773
      %v777 = vsub.f32 %v760, %v773
      %v778 = vmul.f32 %v774, 1.442695
      %v779 = vpow.pop %v778
      %v780 = vmul.f32 %v775, 1.442695
      %v781 = vpow.pop %v780
      %v782 = vmul.f32 %v776, 1.442695
      %v783 = vpow.pop %v782
      %v784 = vmul.f32 %v777, 1.442695
      %v785 = vpow.pop %v784
      %v786 = vsel %vm479, %v779, 0.0
      %v787 = vsel %vm479, %v781, 0.0
      %v788 = vadd.f32 %v786, %v787
      %v789 = vsel %vm479, %v783, 0.0
      %v790 = vadd.f32 %v788, %v789
      %v791 = vsel %vm479, %v785, 0.0
      %v792 = vadd.f32 %v790, %v791
      %v793 = vrot.slane %v792, 4
      %v794 = vadd.f32 %v792, %v793
      %v795 = vrot.slane %v794, 2
      %v796 = vadd.f32 %v794, %v795
      %v797 = vrot.slane %v796, 1
      %v798 = vadd.f32 %v796, %v797
      %v799 = vrcp.pop %v798
      %v800 = vmul.f32 %v798, %v799
      %v801 = vsub.f32 1.0, %v800
      %v802 = vmul.f32 %v799, %v801
      %v803 = vadd.f32 %v799, %v802
      %vm804 = vweird.f32 %v798
      %vm805 = vweird.f32 %v799
      %vm806 = vmor %vm804, %vm805
      %v807 = vsel %vm806, %v799, %v803
      %v808 = vand.u32 2147483647, %v798
      %vm809 = vcmp.eq.f32.partialorder %v808, 8.507059e+37
      %v810 = vand.u32 %v798, 2147483648
      %v811 = vor.u32 1.1754944e-38, %v810
      %v812 = vsel %vm809, %v811, %v807
      %v813 = vmul.f32 %v779, %v812
      %v814 = vmul.f32 %v781, %v812
      %v815 = vmul.f32 %v783, %v812
      %v816 = vmul.f32 %v785, %v812
      %v822 = vsel %vm479, %v813, 0
      %v825 = vsel %vm479, %v814, 0
      %v828 = vsel %vm479, %v815, 0
      %v831 = vsel %vm479, %v816, 0
      %833 = vmatpush.msra.mxu0 0.0
      %834 = vmatpush.msra.mxu0 0.0
      %835 = vmatpush.msra.mxu0 0.0
      %836 = vmatpush.msra.mxu0 0.0
      %837 = vmatpush.msra.mxu0 0.0
      %838 = vmatpush.msra.mxu0 0.0
      %839 = vmatpush.msra.mxu0 0.0
      %840 = vmatpush.msra.mxu0 0.0
      %841 = vmatpush.msra.mxu0 0.0
      %842 = vmatpush.msra.mxu0 0.0
      %843 = vmatpush.msra.mxu0 0.0
      %844 = vmatpush.msra.mxu0 0.0
      %845 = vmatpush.msra.mxu0 %v715
      %846 = vmatpush.msra.mxu0 %v713
      %847 = vmatpush.msra.mxu0 %v711
      %848 = vmatpush.msra.mxu0 %v709
      %849 = vmatmul.f32.gmra.mxu0 %v822
      %v850 = vpop.f32.mrf.mxu0
      %v851 = vadd.f32 0.0, %v850
      %852 = vmatmul.f32.gmra.mxu0 %v825
      %v853 = vpop.f32.mrf.mxu0
      %v854 = vadd.f32 0.0, %v853
      %855 = vmatmul.f32.gmra.mxu0 %v828
      %v856 = vpop.f32.mrf.mxu0
      %v857 = vadd.f32 0.0, %v856
      %858 = vmatmul.f32.gmra.mxu0 %v831
      %v859 = vpop.f32.mrf.mxu0
      %v860 = vadd.f32 0.0, %v859
      %861 = vdwg.mxu0
      %v862 = vmul.f32 %v851, 0.1
      %v863 = vmul.f32 %v854, 0.1
      %v864 = vmul.f32 %v857, 0.1
      %v865 = vmul.f32 %v860, 0.1
      %870 = vrot.lane.b32.xlu0 %v581, 103
      %v871 = vpop.permute.xlu0 %870
      %872 = vrot.lane.b32.xlu0 %v582, 103
      %v873 = vpop.permute.xlu0 %872
      %874 = vrot.lane.b32.xlu0 %v583, 103
      %v875 = vpop.permute.xlu0 %874
      %876 = vrot.lane.b32.xlu0 %v584, 103
      %v877 = vpop.permute.xlu0 %876
      %v882 = vadd.f32 %v862, %v871
      %v883 = vadd.f32 %v863, %v873
      %v884 = vadd.f32 %v864, %v875
      %v885 = vadd.f32 %v865, %v877
      %v886 = vmul.f32 %v882, %v591
      %v887 = vmul.f32 %v883, %v595
      %v888 = vmul.f32 %v884, %v599
      %v889 = vmul.f32 %v885, %v603
      %v890 = vadd.f32 %v886, %v611
      %v891 = vadd.f32 %v887, %v615
      %v892 = vadd.f32 %v888, %v619
      %v893 = vadd.f32 %v889, %v623
      %v895 = vsel %vm629, %v890, 0
      %v898 = vsel %vm629, %v891, 0
      %v901 = vsel %vm629, %v892, 0
      %v904 = vsel %vm629, %v893, 0
      %906 = vmatpush.msra.mxu0 0.0
      %907 = vmatpush.msra.mxu0 0.0
      %908 = vmatpush.msra.mxu0 0.0
      %909 = vmatpush.msra.mxu0 0.0
      %910 = vmatpush.msra.mxu0 0.0
      %911 = vmatpush.msra.mxu0 0.0
      %912 = vmatpush.msra.mxu0 0.0
      %913 = vmatpush.msra.mxu0 0.0
      %914 = vmatpush.msra.mxu0 0.0
      %915 = vmatpush.msra.mxu0 0.0
      %916 = vmatpush.msra.mxu0 0.0
      %917 = vmatpush.msra.mxu0 0.0
      %918 = vmatpush.msra.mxu0 0.0
      %919 = vmatpush.msra.mxu0 %v418
      %920 = vmatpush.msra.mxu0 %v417
      %921 = vmatpush.msra.mxu0 %v416
      %922 = vmatmul.f32.gmra.mxu0 %v895
      %v923 = vpop.f32.mrf.mxu0
      %v924 = vadd.f32 0.0, %v923
      %925 = vmatmul.f32.gmra.mxu0 %v898
      %v926 = vpop.f32.mrf.mxu0
      %v927 = vadd.f32 0.0, %v926
      %928 = vmatmul.f32.gmra.mxu0 %v901
      %v929 = vpop.f32.mrf.mxu0
      %v930 = vadd.f32 0.0, %v929
      %931 = vmatmul.f32.gmra.mxu0 %v904
      %v932 = vpop.f32.mrf.mxu0
      %v933 = vadd.f32 0.0, %v932
      %934 = vdwg.mxu0
      %935 = vmatpush.msra.mxu0 0.0
      %936 = vmatpush.msra.mxu0 0.0
      %937 = vmatpush.msra.mxu0 0.0
      %938 = vmatpush.msra.mxu0 0.0
      %939 = vmatpush.msra.mxu0 0.0
      %940 = vmatpush.msra.mxu0 0.0
      %941 = vmatpush.msra.mxu0 0.0
      %942 = vmatpush.msra.mxu0 0.0
      %943 = vmatpush.msra.mxu0 0.0
      %944 = vmatpush.msra.mxu0 0.0
      %945 = vmatpush.msra.mxu0 0.0
      %946 = vmatpush.msra.mxu0 0.0
      %947 = vmatpush.msra.mxu0 0.0
      %948 = vmatpush.msra.mxu0 %v428
      %949 = vmatpush.msra.mxu0 %v427
      %950 = vmatpush.msra.mxu0 %v426
      %951 = vmatmul.f32.gmra.mxu0 %v895
      %v952 = vpop.f32.mrf.mxu0
      %v953 = vadd.f32 0.0, %v952
      %954 = vmatmul.f32.gmra.mxu0 %v898
      %v955 = vpop.f32.mrf.mxu0
      %v956 = vadd.f32 0.0, %v955
      %957 = vmatmul.f32.gmra.mxu0 %v901
      %v958 = vpop.f32.mrf.mxu0
      %v959 = vadd.f32 0.0, %v958
      %960 = vmatmul.f32.gmra.mxu0 %v904
      %v961 = vpop.f32.mrf.mxu0
      %v962 = vadd.f32 0.0, %v961
      %963 = vdwg.mxu0
      %v964 = vmax.f32 %v924, %v953
      %v965 = vmax.f32 %v927, %v956
      %v966 = vmax.f32 %v930, %v959
      %v967 = vmax.f32 %v933, %v962
      %v968 = vmax.f32 %v964, 0.0
      %v969 = vmax.f32 %v965, 0.0
      %v970 = vmax.f32 %v966, 0.0
      %v971 = vmax.f32 %v967, 0.0
      %v972 = vld [vmem:[%s4] sm:$0xff]
      %v973 = vld [vmem:[%s4 + $0x8] sm:$0xff]
      %v974 = vld [vmem:[%s4 + $0x10] sm:$0xff]
      %v975 = vld [vmem:[%s4 + $0x18] sm:$0xff]
      %980 = vrot.lane.b32.xlu0 %v704, 118
      %v981 = vpop.permute.xlu0 %980
      %982 = vrot.lane.b32.xlu0 %v705, 118
      %v983 = vpop.permute.xlu0 %982
      %984 = vrot.lane.b32.xlu0 %v706, 118
      %v985 = vpop.permute.xlu0 %984
      %986 = vrot.lane.b32.xlu0 %v707, 118
      %v987 = vpop.permute.xlu0 %986
      %992 = vrot.lane.b32.xlu0 %v704, 2
      %v993 = vpop.permute.xlu0 %992
      %994 = vrot.lane.b32.xlu0 %v705, 2
      %v995 = vpop.permute.xlu0 %994
      %996 = vrot.lane.b32.xlu0 %v706, 2
      %v997 = vpop.permute.xlu0 %996
      %998 = vrot.lane.b32.xlu0 %v707, 2
      %v999 = vpop.permute.xlu0 %998
      %1004 = vrot.lane.b32.xlu0 %v704, 14
      %v1005 = vpop.permute.xlu0 %1004
      %1006 = vrot.lane.b32.xlu0 %v705, 14
      %v1007 = vpop.permute.xlu0 %1006
      %1008 = vrot.lane.b32.xlu0 %v706, 14
      %v1009 = vpop.permute.xlu0 %1008
      %1010 = vrot.lane.b32.xlu0 %v707, 14
      %v1011 = vpop.permute.xlu0 %1010
      %vm1016 = vcmask 15360
      %v1017 = vsel %vm1016, %v981, %v993
      %v1018 = vsel %vm1016, %v983, %v995
      %v1019 = vsel %vm1016, %v985, %v997
      %v1020 = vsel %vm1016, %v987, %v999
      %vm1021 = vcmask 113664
      %v1022 = vsel %vm1021, %v1017, %v1005
      %v1023 = vsel %vm1021, %v1018, %v1007
      %v1024 = vsel %vm1021, %v1019, %v1009
      %v1025 = vsel %vm1021, %v1020, %v1011
      %v1026 = vld [vmem:[%s3] sm:$0xff]
      %v1027 = vld [vmem:[%s3 + $0x8] sm:$0xff]
      %v1028 = vld [vmem:[%s3 + $0x10] sm:$0xff]
      %v1029 = vld [vmem:[%s3 + $0x18] sm:$0xff]
      %s1030 = scalar_lea.vmem %s3, 32
      %v1031 = vld [vmem:[%s1030] sm:$0xff]
      %v1032 = vld [vmem:[%s1030 + $0x8] sm:$0xff]
      %v1033 = vld [vmem:[%s1030 + $0x10] sm:$0xff]
      %v1034 = vld [vmem:[%s1030 + $0x18] sm:$0xff]
      %1039 = vrot.lane.b32.xlu0 %v1022, 127
      %v1040 = vpop.permute.xlu0 %1039
      %1041 = vrot.lane.b32.xlu0 %v1023, 127
      %v1042 = vpop.permute.xlu0 %1041
      %1043 = vrot.lane.b32.xlu0 %v1024, 127
      %v1044 = vpop.permute.xlu0 %1043
      %1045 = vrot.lane.b32.xlu0 %v1025, 127
      %v1046 = vpop.permute.xlu0 %1045
      %v1052 = vsel %vm479, %v1031, 0
      %v1055 = vsel %vm479, %v1032, 0
      %v1058 = vsel %vm479, %v1033, 0
      %v1061 = vsel %vm479, %v1034, 0
      %1063 = vmatpush.msra.mxu0 0.0
      %1064 = vmatpush.msra.mxu0 0.0
      %1065 = vmatpush.msra.mxu0 0.0
      %1066 = vmatpush.msra.mxu0 0.0
      %1067 = vmatpush.msra.mxu0 0.0
      %1068 = vmatpush.msra.mxu0 0.0
      %1069 = vmatpush.msra.mxu0 0.0
      %1070 = vmatpush.msra.mxu0 0.0
      %1071 = vmatpush.msra.mxu0 0.0
      %1072 = vmatpush.msra.mxu0 0.0
      %1073 = vmatpush.msra.mxu0 0.0
      %1074 = vmatpush.msra.mxu0 0.0
      %1075 = vmatpush.msra.mxu0 %v1046
      %1076 = vmatpush.msra.mxu0 %v1044
      %1077 = vmatpush.msra.mxu0 %v1042
      %1078 = vmatpush.msra.mxu0 %v1040
      %1079 = vmatmul.f32.gmra.mxu0 %v1052
      %v1080 = vpop.f32.mrf.mxu0
      %v1081 = vadd.f32 0.0, %v1080
      %1082 = vmatmul.f32.gmra.mxu0 %v1055
      %v1083 = vpop.f32.mrf.mxu0
      %v1084 = vadd.f32 0.0, %v1083
      %1085 = vmatmul.f32.gmra.mxu0 %v1058
      %v1086 = vpop.f32.mrf.mxu0
      %v1087 = vadd.f32 0.0, %v1086
      %1088 = vmatmul.f32.gmra.mxu0 %v1061
      %v1089 = vpop.f32.mrf.mxu0
      %v1090 = vadd.f32 0.0, %v1089
      %1091 = vdwg.mxu0
      %v1093 = vsel %vm479, %v1026, 0
      %v1096 = vsel %vm479, %v1027, 0
      %v1099 = vsel %vm479, %v1028, 0
      %v1102 = vsel %vm479, %v1029, 0
      %1104 = vmatpush.msra.mxu0 0.0
      %1105 = vmatpush.msra.mxu0 0.0
      %1106 = vmatpush.msra.mxu0 0.0
      %1107 = vmatpush.msra.mxu0 0.0
      %1108 = vmatpush.msra.mxu0 0.0
      %1109 = vmatpush.msra.mxu0 0.0
      %1110 = vmatpush.msra.mxu0 0.0
      %1111 = vmatpush.msra.mxu0 0.0
      %1112 = vmatpush.msra.mxu0 0.0
      %1113 = vmatpush.msra.mxu0 0.0
      %1114 = vmatpush.msra.mxu0 0.0
      %1115 = vmatpush.msra.mxu0 0.0
      %1116 = vmatpush.msra.mxu0 %v1025
      %1117 = vmatpush.msra.mxu0 %v1024
      %1118 = vmatpush.msra.mxu0 %v1023
      %1119 = vmatpush.msra.mxu0 %v1022
      %1120 = vmatmul.f32.gmra.mxu0 %v1093
      %v1121 = vpop.f32.mrf.mxu0
      %v1122 = vadd.f32 %v1081, %v1121
      %1123 = vmatmul.f32.gmra.mxu0 %v1096
      %v1124 = vpop.f32.mrf.mxu0
      %v1125 = vadd.f32 %v1084, %v1124
      %1126 = vmatmul.f32.gmra.mxu0 %v1099
      %v1127 = vpop.f32.mrf.mxu0
      %v1128 = vadd.f32 %v1087, %v1127
      %1129 = vmatmul.f32.gmra.mxu0 %v1102
      %v1130 = vpop.f32.mrf.mxu0
      %v1131 = vadd.f32 %v1090, %v1130
      %1132 = vdwg.mxu0
      %s1133 = scalar_lea.vmem %s3, 64
      %v1134 = vld [vmem:[%s1133] sm:$0xff]
      %v1135 = vld [vmem:[%s1133 + $0x8] sm:$0xff]
      %v1136 = vld [vmem:[%s1133 + $0x10] sm:$0xff]
      %v1137 = vld [vmem:[%s1133 + $0x18] sm:$0xff]
      %1138 = vrot.lane.b32.xlu0 %v1022, 126
      %v1139 = vpop.permute.xlu0 %1138
      %1140 = vrot.lane.b32.xlu0 %v1023, 126
      %v1141 = vpop.permute.xlu0 %1140
      %1142 = vrot.lane.b32.xlu0 %v1024, 126
      %v1143 = vpop.permute.xlu0 %1142
      %1144 = vrot.lane.b32.xlu0 %v1025, 126
      %v1145 = vpop.permute.xlu0 %1144
      %v1151 = vsel %vm479, %v1134, 0
      %v1154 = vsel %vm479, %v1135, 0
      %v1157 = vsel %vm479, %v1136, 0
      %v1160 = vsel %vm479, %v1137, 0
      %1162 = vmatpush.msra.mxu0 0.0
      %1163 = vmatpush.msra.mxu0 0.0
      %1164 = vmatpush.msra.mxu0 0.0
      %1165 = vmatpush.msra.mxu0 0.0
      %1166 = vmatpush.msra.mxu0 0.0
      %1167 = vmatpush.msra.mxu0 0.0
      %1168 = vmatpush.msra.mxu0 0.0
      %1169 = vmatpush.msra.mxu0 0.0
      %1170 = vmatpush.msra.mxu0 0.0
      %1171 = vmatpush.msra.mxu0 0.0
      %1172 = vmatpush.msra.mxu0 0.0
      %1173 = vmatpush.msra.mxu0 0.0
      %1174 = vmatpush.msra.mxu0 %v1145
      %1175 = vmatpush.msra.mxu0 %v1143
      %1176 = vmatpush.msra.mxu0 %v1141
      %1177 = vmatpush.msra.mxu0 %v1139
      %1178 = vmatmul.f32.gmra.mxu0 %v1151
      %v1179 = vpop.f32.mrf.mxu0
      %v1180 = vadd.f32 0.0, %v1179
      %1181 = vmatmul.f32.gmra.mxu0 %v1154
      %v1182 = vpop.f32.mrf.mxu0
      %v1183 = vadd.f32 0.0, %v1182
      %1184 = vmatmul.f32.gmra.mxu0 %v1157
      %v1185 = vpop.f32.mrf.mxu0
      %v1186 = vadd.f32 0.0, %v1185
      %1187 = vmatmul.f32.gmra.mxu0 %v1160
      %v1188 = vpop.f32.mrf.mxu0
      %v1189 = vadd.f32 0.0, %v1188
      %1190 = vdwg.mxu0
      %v1191 = vadd.f32 %v1122, %v1180
      %v1192 = vadd.f32 %v1125, %v1183
      %v1193 = vadd.f32 %v1128, %v1186
      %v1194 = vadd.f32 %v1131, %v1189
      %s1195 = scalar_lea.vmem %s3, 96
      %v1196 = vld [vmem:[%s1195] sm:$0xff]
      %v1197 = vld [vmem:[%s1195 + $0x8] sm:$0xff]
      %v1198 = vld [vmem:[%s1195 + $0x10] sm:$0xff]
      %v1199 = vld [vmem:[%s1195 + $0x18] sm:$0xff]
      %1200 = vrot.lane.b32.xlu0 %v1022, 125
      %v1201 = vpop.permute.xlu0 %1200
      %1202 = vrot.lane.b32.xlu0 %v1023, 125
      %v1203 = vpop.permute.xlu0 %1202
      %1204 = vrot.lane.b32.xlu0 %v1024, 125
      %v1205 = vpop.permute.xlu0 %1204
      %1206 = vrot.lane.b32.xlu0 %v1025, 125
      %v1207 = vpop.permute.xlu0 %1206
      %v1213 = vsel %vm479, %v1196, 0
      %v1216 = vsel %vm479, %v1197, 0
      %v1219 = vsel %vm479, %v1198, 0
      %v1222 = vsel %vm479, %v1199, 0
      %1224 = vmatpush.msra.mxu0 0.0
      %1225 = vmatpush.msra.mxu0 0.0
      %1226 = vmatpush.msra.mxu0 0.0
      %1227 = vmatpush.msra.mxu0 0.0
      %1228 = vmatpush.msra.mxu0 0.0
      %1229 = vmatpush.msra.mxu0 0.0
      %1230 = vmatpush.msra.mxu0 0.0
      %1231 = vmatpush.msra.mxu0 0.0
      %1232 = vmatpush.msra.mxu0 0.0
      %1233 = vmatpush.msra.mxu0 0.0
      %1234 = vmatpush.msra.mxu0 0.0
      %1235 = vmatpush.msra.mxu0 0.0
      %1236 = vmatpush.msra.mxu0 %v1207
      %1237 = vmatpush.msra.mxu0 %v1205
      %1238 = vmatpush.msra.mxu0 %v1203
      %1239 = vmatpush.msra.mxu0 %v1201
      %1240 = vmatmul.f32.gmra.mxu0 %v1213
      %v1241 = vpop.f32.mrf.mxu0
      %v1242 = vadd.f32 0.0, %v1241
      %1243 = vmatmul.f32.gmra.mxu0 %v1216
      %v1244 = vpop.f32.mrf.mxu0
      %v1245 = vadd.f32 0.0, %v1244
      %1246 = vmatmul.f32.gmra.mxu0 %v1219
      %v1247 = vpop.f32.mrf.mxu0
      %v1248 = vadd.f32 0.0, %v1247
      %1249 = vmatmul.f32.gmra.mxu0 %v1222
      %v1250 = vpop.f32.mrf.mxu0
      %v1251 = vadd.f32 0.0, %v1250
      %1252 = vdwg.mxu0
      %v1253 = vadd.f32 %v1191, %v1242
      %v1254 = vadd.f32 %v1192, %v1245
      %v1255 = vadd.f32 %v1193, %v1248
      %v1256 = vadd.f32 %v1194, %v1251
      %s1257 = scalar_lea.vmem %s3, 128
      %v1258 = vld [vmem:[%s1257] sm:$0xff]
      %v1259 = vld [vmem:[%s1257 + $0x8] sm:$0xff]
      %v1260 = vld [vmem:[%s1257 + $0x10] sm:$0xff]
      %v1261 = vld [vmem:[%s1257 + $0x18] sm:$0xff]
      %1262 = vrot.lane.b32.xlu0 %v1022, 124
      %v1263 = vpop.permute.xlu0 %1262
      %1264 = vrot.lane.b32.xlu0 %v1023, 124
      %v1265 = vpop.permute.xlu0 %1264
      %1266 = vrot.lane.b32.xlu0 %v1024, 124
      %v1267 = vpop.permute.xlu0 %1266
      %1268 = vrot.lane.b32.xlu0 %v1025, 124
      %v1269 = vpop.permute.xlu0 %1268
      %v1275 = vsel %vm479, %v1258, 0
      %v1278 = vsel %vm479, %v1259, 0
      %v1281 = vsel %vm479, %v1260, 0
      %v1284 = vsel %vm479, %v1261, 0
      %1286 = vmatpush.msra.mxu0 0.0
      %1287 = vmatpush.msra.mxu0 0.0
      %1288 = vmatpush.msra.mxu0 0.0
      %1289 = vmatpush.msra.mxu0 0.0
      %1290 = vmatpush.msra.mxu0 0.0
      %1291 = vmatpush.msra.mxu0 0.0
      %1292 = vmatpush.msra.mxu0 0.0
      %1293 = vmatpush.msra.mxu0 0.0
      %1294 = vmatpush.msra.mxu0 0.0
      %1295 = vmatpush.msra.mxu0 0.0
      %1296 = vmatpush.msra.mxu0 0.0
      %1297 = vmatpush.msra.mxu0 0.0
      %1298 = vmatpush.msra.mxu0 %v1269
      %1299 = vmatpush.msra.mxu0 %v1267
      %1300 = vmatpush.msra.mxu0 %v1265
      %1301 = vmatpush.msra.mxu0 %v1263
      %1302 = vmatmul.f32.gmra.mxu0 %v1275
      %v1303 = vpop.f32.mrf.mxu0
      %v1304 = vadd.f32 0.0, %v1303
      %1305 = vmatmul.f32.gmra.mxu0 %v1278
      %v1306 = vpop.f32.mrf.mxu0
      %v1307 = vadd.f32 0.0, %v1306
      %1308 = vmatmul.f32.gmra.mxu0 %v1281
      %v1309 = vpop.f32.mrf.mxu0
      %v1310 = vadd.f32 0.0, %v1309
      %1311 = vmatmul.f32.gmra.mxu0 %v1284
      %v1312 = vpop.f32.mrf.mxu0
      %v1313 = vadd.f32 0.0, %v1312
      %1314 = vdwg.mxu0
      %v1315 = vadd.f32 %v1253, %v1304
      %v1316 = vadd.f32 %v1254, %v1307
      %v1317 = vadd.f32 %v1255, %v1310
      %v1318 = vadd.f32 %v1256, %v1313
      %1320 = vset.pattern.permute.xlu0 0
      %1321 = vperm.xlu0 %1320, %v972
      %v1322 = vpop.permute.xlu0 %1321
      %1325 = vset.pattern.permute.xlu0 0
      %1326 = vperm.xlu0 %1325, %v973
      %v1327 = vpop.permute.xlu0 %1326
      %1330 = vset.pattern.permute.xlu0 0
      %1331 = vperm.xlu0 %1330, %v974
      %v1332 = vpop.permute.xlu0 %1331
      %1335 = vset.pattern.permute.xlu0 0
      %1336 = vperm.xlu0 %1335, %v975
      %v1337 = vpop.permute.xlu0 %1336
      %v1339 = vadd.f32 %v1315, %v1322
      %v1340 = vadd.f32 %v1316, %v1327
      %v1341 = vadd.f32 %v1317, %v1332
      %v1342 = vadd.f32 %v1318, %v1337
      %1347 = vrot.lane.b32.xlu0 %v968, 118
      %v1348 = vpop.permute.xlu0 %1347
      %1349 = vrot.lane.b32.xlu0 %v969, 118
      %v1350 = vpop.permute.xlu0 %1349
      %1351 = vrot.lane.b32.xlu0 %v970, 118
      %v1352 = vpop.permute.xlu0 %1351
      %1353 = vrot.lane.b32.xlu0 %v971, 118
      %v1354 = vpop.permute.xlu0 %1353
      %1359 = vrot.lane.b32.xlu0 %v968, 2
      %v1360 = vpop.permute.xlu0 %1359
      %1361 = vrot.lane.b32.xlu0 %v969, 2
      %v1362 = vpop.permute.xlu0 %1361
      %1363 = vrot.lane.b32.xlu0 %v970, 2
      %v1364 = vpop.permute.xlu0 %1363
      %1365 = vrot.lane.b32.xlu0 %v971, 2
      %v1366 = vpop.permute.xlu0 %1365
      %1371 = vrot.lane.b32.xlu0 %v968, 14
      %v1372 = vpop.permute.xlu0 %1371
      %1373 = vrot.lane.b32.xlu0 %v969, 14
      %v1374 = vpop.permute.xlu0 %1373
      %1375 = vrot.lane.b32.xlu0 %v970, 14
      %v1376 = vpop.permute.xlu0 %1375
      %1377 = vrot.lane.b32.xlu0 %v971, 14
      %v1378 = vpop.permute.xlu0 %1377
      %v1383 = vsel %vm1016, %v1348, %v1360
      %v1384 = vsel %vm1016, %v1350, %v1362
      %v1385 = vsel %vm1016, %v1352, %v1364
      %v1386 = vsel %vm1016, %v1354, %v1366
      %v1387 = vsel %vm1021, %v1383, %v1372
      %v1388 = vsel %vm1021, %v1384, %v1374
      %v1389 = vsel %vm1021, %v1385, %v1376
      %v1390 = vsel %vm1021, %v1386, %v1378
      %1395 = vrot.lane.b32.xlu0 %v1387, 127
      %v1396 = vpop.permute.xlu0 %1395
      %1397 = vrot.lane.b32.xlu0 %v1388, 127
      %v1398 = vpop.permute.xlu0 %1397
      %1399 = vrot.lane.b32.xlu0 %v1389, 127
      %v1400 = vpop.permute.xlu0 %1399
      %1401 = vrot.lane.b32.xlu0 %v1390, 127
      %v1402 = vpop.permute.xlu0 %1401
      %1407 = vmatpush.msra.mxu0 0.0
      %1408 = vmatpush.msra.mxu0 0.0
      %1409 = vmatpush.msra.mxu0 0.0
      %1410 = vmatpush.msra.mxu0 0.0
      %1411 = vmatpush.msra.mxu0 0.0
      %1412 = vmatpush.msra.mxu0 0.0
      %1413 = vmatpush.msra.mxu0 0.0
      %1414 = vmatpush.msra.mxu0 0.0
      %1415 = vmatpush.msra.mxu0 0.0
      %1416 = vmatpush.msra.mxu0 0.0
      %1417 = vmatpush.msra.mxu0 0.0
      %1418 = vmatpush.msra.mxu0 0.0
      %1419 = vmatpush.msra.mxu0 %v1402
      %1420 = vmatpush.msra.mxu0 %v1400
      %1421 = vmatpush.msra.mxu0 %v1398
      %1422 = vmatpush.msra.mxu0 %v1396
      %1423 = vmatmul.f32.gmra.mxu0 %v1052
      %v1424 = vpop.f32.mrf.mxu0
      %v1425 = vadd.f32 0.0, %v1424
      %1426 = vmatmul.f32.gmra.mxu0 %v1055
      %v1427 = vpop.f32.mrf.mxu0
      %v1428 = vadd.f32 0.0, %v1427
      %1429 = vmatmul.f32.gmra.mxu0 %v1058
      %v1430 = vpop.f32.mrf.mxu0
      %v1431 = vadd.f32 0.0, %v1430
      %1432 = vmatmul.f32.gmra.mxu0 %v1061
      %v1433 = vpop.f32.mrf.mxu0
      %v1434 = vadd.f32 0.0, %v1433
      %1435 = vdwg.mxu0
      %1436 = vmatpush.msra.mxu0 0.0
      %1437 = vmatpush.msra.mxu0 0.0
      %1438 = vmatpush.msra.mxu0 0.0
      %1439 = vmatpush.msra.mxu0 0.0
      %1440 = vmatpush.msra.mxu0 0.0
      %1441 = vmatpush.msra.mxu0 0.0
      %1442 = vmatpush.msra.mxu0 0.0
      %1443 = vmatpush.msra.mxu0 0.0
      %1444 = vmatpush.msra.mxu0 0.0
      %1445 = vmatpush.msra.mxu0 0.0
      %1446 = vmatpush.msra.mxu0 0.0
      %1447 = vmatpush.msra.mxu0 0.0
      %1448 = vmatpush.msra.mxu0 %v1390
      %1449 = vmatpush.msra.mxu0 %v1389
      %1450 = vmatpush.msra.mxu0 %v1388
      %1451 = vmatpush.msra.mxu0 %v1387
      %1452 = vmatmul.f32.gmra.mxu0 %v1093
      %v1453 = vpop.f32.mrf.mxu0
      %v1454 = vadd.f32 %v1425, %v1453
      %1455 = vmatmul.f32.gmra.mxu0 %v1096
      %v1456 = vpop.f32.mrf.mxu0
      %v1457 = vadd.f32 %v1428, %v1456
      %1458 = vmatmul.f32.gmra.mxu0 %v1099
      %v1459 = vpop.f32.mrf.mxu0
      %v1460 = vadd.f32 %v1431, %v1459
      %1461 = vmatmul.f32.gmra.mxu0 %v1102
      %v1462 = vpop.f32.mrf.mxu0
      %v1463 = vadd.f32 %v1434, %v1462
      %1464 = vdwg.mxu0
      %1465 = vrot.lane.b32.xlu0 %v1387, 126
      %v1466 = vpop.permute.xlu0 %1465
      %1467 = vrot.lane.b32.xlu0 %v1388, 126
      %v1468 = vpop.permute.xlu0 %1467
      %1469 = vrot.lane.b32.xlu0 %v1389, 126
      %v1470 = vpop.permute.xlu0 %1469
      %1471 = vrot.lane.b32.xlu0 %v1390, 126
      %v1472 = vpop.permute.xlu0 %1471
      %1477 = vmatpush.msra.mxu0 0.0
      %1478 = vmatpush.msra.mxu0 0.0
      %1479 = vmatpush.msra.mxu0 0.0
      %1480 = vmatpush.msra.mxu0 0.0
      %1481 = vmatpush.msra.mxu0 0.0
      %1482 = vmatpush.msra.mxu0 0.0
      %1483 = vmatpush.msra.mxu0 0.0
      %1484 = vmatpush.msra.mxu0 0.0
      %1485 = vmatpush.msra.mxu0 0.0
      %1486 = vmatpush.msra.mxu0 0.0
      %1487 = vmatpush.msra.mxu0 0.0
      %1488 = vmatpush.msra.mxu0 0.0
      %1489 = vmatpush.msra.mxu0 %v1472
      %1490 = vmatpush.msra.mxu0 %v1470
      %1491 = vmatpush.msra.mxu0 %v1468
      %1492 = vmatpush.msra.mxu0 %v1466
      %1493 = vmatmul.f32.gmra.mxu0 %v1151
      %v1494 = vpop.f32.mrf.mxu0
      %v1495 = vadd.f32 0.0, %v1494
      %1496 = vmatmul.f32.gmra.mxu0 %v1154
      %v1497 = vpop.f32.mrf.mxu0
      %v1498 = vadd.f32 0.0, %v1497
      %1499 = vmatmul.f32.gmra.mxu0 %v1157
      %v1500 = vpop.f32.mrf.mxu0
      %v1501 = vadd.f32 0.0, %v1500
      %1502 = vmatmul.f32.gmra.mxu0 %v1160
      %v1503 = vpop.f32.mrf.mxu0
      %v1504 = vadd.f32 0.0, %v1503
      %1505 = vdwg.mxu0
      %v1506 = vadd.f32 %v1454, %v1495
      %v1507 = vadd.f32 %v1457, %v1498
      %v1508 = vadd.f32 %v1460, %v1501
      %v1509 = vadd.f32 %v1463, %v1504
      %1510 = vrot.lane.b32.xlu0 %v1387, 125
      %v1511 = vpop.permute.xlu0 %1510
      %1512 = vrot.lane.b32.xlu0 %v1388, 125
      %v1513 = vpop.permute.xlu0 %1512
      %1514 = vrot.lane.b32.xlu0 %v1389, 125
      %v1515 = vpop.permute.xlu0 %1514
      %1516 = vrot.lane.b32.xlu0 %v1390, 125
      %v1517 = vpop.permute.xlu0 %1516
      %1522 = vmatpush.msra.mxu0 0.0
      %1523 = vmatpush.msra.mxu0 0.0
      %1524 = vmatpush.msra.mxu0 0.0
      %1525 = vmatpush.msra.mxu0 0.0
      %1526 = vmatpush.msra.mxu0 0.0
      %1527 = vmatpush.msra.mxu0 0.0
      %1528 = vmatpush.msra.mxu0 0.0
      %1529 = vmatpush.msra.mxu0 0.0
      %1530 = vmatpush.msra.mxu0 0.0
      %1531 = vmatpush.msra.mxu0 0.0
      %1532 = vmatpush.msra.mxu0 0.0
      %1533 = vmatpush.msra.mxu0 0.0
      %1534 = vmatpush.msra.mxu0 %v1517
      %1535 = vmatpush.msra.mxu0 %v1515
      %1536 = vmatpush.msra.mxu0 %v1513
      %1537 = vmatpush.msra.mxu0 %v1511
      %1538 = vmatmul.f32.gmra.mxu0 %v1213
      %v1539 = vpop.f32.mrf.mxu0
      %v1540 = vadd.f32 0.0, %v1539
      %1541 = vmatmul.f32.gmra.mxu0 %v1216
      %v1542 = vpop.f32.mrf.mxu0
      %v1543 = vadd.f32 0.0, %v1542
      %1544 = vmatmul.f32.gmra.mxu0 %v1219
      %v1545 = vpop.f32.mrf.mxu0
      %v1546 = vadd.f32 0.0, %v1545
      %1547 = vmatmul.f32.gmra.mxu0 %v1222
      %v1548 = vpop.f32.mrf.mxu0
      %v1549 = vadd.f32 0.0, %v1548
      %1550 = vdwg.mxu0
      %v1551 = vadd.f32 %v1506, %v1540
      %v1552 = vadd.f32 %v1507, %v1543
      %v1553 = vadd.f32 %v1508, %v1546
      %v1554 = vadd.f32 %v1509, %v1549
      %1555 = vrot.lane.b32.xlu0 %v1387, 124
      %v1556 = vpop.permute.xlu0 %1555
      %1557 = vrot.lane.b32.xlu0 %v1388, 124
      %v1558 = vpop.permute.xlu0 %1557
      %1559 = vrot.lane.b32.xlu0 %v1389, 124
      %v1560 = vpop.permute.xlu0 %1559
      %1561 = vrot.lane.b32.xlu0 %v1390, 124
      %v1562 = vpop.permute.xlu0 %1561
      %1567 = vmatpush.msra.mxu0 0.0
      %1568 = vmatpush.msra.mxu0 0.0
      %1569 = vmatpush.msra.mxu0 0.0
      %1570 = vmatpush.msra.mxu0 0.0
      %1571 = vmatpush.msra.mxu0 0.0
      %1572 = vmatpush.msra.mxu0 0.0
      %1573 = vmatpush.msra.mxu0 0.0
      %1574 = vmatpush.msra.mxu0 0.0
      %1575 = vmatpush.msra.mxu0 0.0
      %1576 = vmatpush.msra.mxu0 0.0
      %1577 = vmatpush.msra.mxu0 0.0
      %1578 = vmatpush.msra.mxu0 0.0
      %1579 = vmatpush.msra.mxu0 %v1562
      %1580 = vmatpush.msra.mxu0 %v1560
      %1581 = vmatpush.msra.mxu0 %v1558
      %1582 = vmatpush.msra.mxu0 %v1556
      %1583 = vmatmul.f32.gmra.mxu0 %v1275
      %v1584 = vpop.f32.mrf.mxu0
      %v1585 = vadd.f32 0.0, %v1584
      %1586 = vmatmul.f32.gmra.mxu0 %v1278
      %v1587 = vpop.f32.mrf.mxu0
      %v1588 = vadd.f32 0.0, %v1587
      %1589 = vmatmul.f32.gmra.mxu0 %v1281
      %v1590 = vpop.f32.mrf.mxu0
      %v1591 = vadd.f32 0.0, %v1590
      %1592 = vmatmul.f32.gmra.mxu0 %v1284
      %v1593 = vpop.f32.mrf.mxu0
      %v1594 = vadd.f32 0.0, %v1593
      %1595 = vdwg.mxu0
      %v1596 = vadd.f32 %v1551, %v1585
      %v1597 = vadd.f32 %v1552, %v1588
      %v1598 = vadd.f32 %v1553, %v1591
      %v1599 = vadd.f32 %v1554, %v1594
      %v1600 = vadd.f32 %v1596, %v1322
      %v1601 = vadd.f32 %v1597, %v1327
      %v1602 = vadd.f32 %v1598, %v1332
      %v1603 = vadd.f32 %v1599, %v1337
      %vm1604 = vcmask 97280
      %v1606 = vsel %vm1604, %v1339, 0
      %v1609 = vsel %vm1604, %v1340, 0
      %v1612 = vsel %vm1604, %v1341, 0
      %v1615 = vsel %vm1604, %v1342, 0
      %v1618 = vsel %vm1604, %v1600, 0
      %v1621 = vsel %vm1604, %v1601, 0
      %v1624 = vsel %vm1604, %v1602, 0
      %v1627 = vsel %vm1604, %v1603, 0
      %1629 = vmatpush.xpose.msra.mxu0 0.0
      %1630 = vmatpush.xpose.msra.mxu0 0.0
      %1631 = vmatpush.xpose.msra.mxu0 0.0
      %1632 = vmatpush.xpose.msra.mxu0 0.0
      %1633 = vmatpush.xpose.msra.mxu0 0.0
      %1634 = vmatpush.xpose.msra.mxu0 0.0
      %1635 = vmatpush.xpose.msra.mxu0 0.0
      %1636 = vmatpush.xpose.msra.mxu0 0.0
      %1637 = vmatpush.xpose.msra.mxu0 0.0
      %1638 = vmatpush.xpose.msra.mxu0 0.0
      %1639 = vmatpush.xpose.msra.mxu0 0.0
      %1640 = vmatpush.xpose.msra.mxu0 0.0
      %1641 = vmatpush.xpose.msra.mxu0 %v1627
      %1642 = vmatpush.xpose.msra.mxu0 %v1624
      %1643 = vmatpush.xpose.msra.mxu0 %v1621
      %1644 = vmatpush.xpose.msra.mxu0 %v1618
      %1645 = vmatmul.f32.gmra.mxu0 %v1606
      %v1646 = vpop.f32.mrf.mxu0
      %v1647 = vadd.f32 0.0, %v1646
      %1648 = vmatmul.f32.gmra.mxu0 %v1609
      %v1649 = vpop.f32.mrf.mxu0
      %v1650 = vadd.f32 0.0, %v1649
      %1651 = vmatmul.f32.gmra.mxu0 %v1612
      %v1652 = vpop.f32.mrf.mxu0
      %v1653 = vadd.f32 0.0, %v1652
      %1654 = vmatmul.f32.gmra.mxu0 %v1615
      %v1655 = vpop.f32.mrf.mxu0
      %v1656 = vadd.f32 0.0, %v1655
      %1657 = vdwg.mxu0
      %v1658 = vmul.f32 %v1647, 0.2
      %v1659 = vmul.f32 %v1650, 0.2
      %v1660 = vmul.f32 %v1653, 0.2
      %v1661 = vmul.f32 %v1656, 0.2
      %v1662 = vmax.f32 %v1647, %v1658
      %v1663 = vmax.f32 %v1650, %v1659
      %v1664 = vmax.f32 %v1653, %v1660
      %v1665 = vmax.f32 %v1656, %v1661
      %v1666 = vsel %vm479, %v1662, -inf
      %v1667 = vsel %vm479, %v1663, -inf
      %v1668 = vsel %vm479, %v1664, -inf
      %v1669 = vsel %vm479, %v1665, -inf
      %v1670 = vmax.f32 %v1666, %v1667
      %v1671 = vmax.f32 %v1668, %v1669
      %v1672 = vmax.f32 %v1670, %v1671
      %v1673 = vrot.slane %v1672, 4
      %v1674 = vmax.f32 %v1672, %v1673
      %v1675 = vrot.slane %v1674, 2
      %v1676 = vmax.f32 %v1674, %v1675
      %v1677 = vrot.slane %v1676, 1
      %v1678 = vmax.f32 %v1676, %v1677
      %v1679 = vsub.f32 %v1662, %v1678
      %v1680 = vsub.f32 %v1663, %v1678
      %v1681 = vsub.f32 %v1664, %v1678
      %v1682 = vsub.f32 %v1665, %v1678
      %v1683 = vmul.f32 %v1679, 1.442695
      %v1684 = vpow.pop %v1683
      %v1685 = vmul.f32 %v1680, 1.442695
      %v1686 = vpow.pop %v1685
      %v1687 = vmul.f32 %v1681, 1.442695
      %v1688 = vpow.pop %v1687
      %v1689 = vmul.f32 %v1682, 1.442695
      %v1690 = vpow.pop %v1689
      %v1691 = vsel %vm479, %v1684, 0.0
      %v1692 = vsel %vm479, %v1686, 0.0
      %v1693 = vadd.f32 %v1691, %v1692
      %v1694 = vsel %vm479, %v1688, 0.0
      %v1695 = vadd.f32 %v1693, %v1694
      %v1696 = vsel %vm479, %v1690, 0.0
      %v1697 = vadd.f32 %v1695, %v1696
      %v1698 = vrot.slane %v1697, 4
      %v1699 = vadd.f32 %v1697, %v1698
      %v1700 = vrot.slane %v1699, 2
      %v1701 = vadd.f32 %v1699, %v1700
      %v1702 = vrot.slane %v1701, 1
      %v1703 = vadd.f32 %v1701, %v1702
      %v1704 = vrcp.pop %v1703
      %v1705 = vmul.f32 %v1703, %v1704
      %v1706 = vsub.f32 1.0, %v1705
      %v1707 = vmul.f32 %v1704, %v1706
      %v1708 = vadd.f32 %v1704, %v1707
      %vm1709 = vweird.f32 %v1703
      %vm1710 = vweird.f32 %v1704
      %vm1711 = vmor %vm1709, %vm1710
      %v1712 = vsel %vm1711, %v1704, %v1708
      %v1713 = vand.u32 2147483647, %v1703
      %vm1714 = vcmp.eq.f32.partialorder %v1713, 8.507059e+37
      %v1715 = vand.u32 %v1703, 2147483648
      %v1716 = vor.u32 1.1754944e-38, %v1715
      %v1717 = vsel %vm1714, %v1716, %v1712
      %v1718 = vmul.f32 %v1684, %v1717
      %v1719 = vmul.f32 %v1686, %v1717
      %v1720 = vmul.f32 %v1688, %v1717
      %v1721 = vmul.f32 %v1690, %v1717
      %v1723 = vsel %vm479, %v1718, 0
      %v1726 = vsel %vm479, %v1719, 0
      %v1729 = vsel %vm479, %v1720, 0
      %v1732 = vsel %vm479, %v1721, 0
      %1734 = vmatpush.msra.mxu0 0.0
      %1735 = vmatpush.msra.mxu0 0.0
      %1736 = vmatpush.msra.mxu0 0.0
      %1737 = vmatpush.msra.mxu0 0.0
      %1738 = vmatpush.msra.mxu0 0.0
      %1739 = vmatpush.msra.mxu0 0.0
      %1740 = vmatpush.msra.mxu0 0.0
      %1741 = vmatpush.msra.mxu0 0.0
      %1742 = vmatpush.msra.mxu0 0.0
      %1743 = vmatpush.msra.mxu0 0.0
      %1744 = vmatpush.msra.mxu0 0.0
      %1745 = vmatpush.msra.mxu0 0.0
      %1746 = vmatpush.msra.mxu0 %v1342
      %1747 = vmatpush.msra.mxu0 %v1341
      %1748 = vmatpush.msra.mxu0 %v1340
      %1749 = vmatpush.msra.mxu0 %v1339
      %1750 = vmatmul.f32.gmra.mxu0 %v1723
      %v1751 = vpop.f32.mrf.mxu0
      %v1752 = vadd.f32 0.0, %v1751
      %1753 = vmatmul.f32.gmra.mxu0 %v1726
      %v1754 = vpop.f32.mrf.mxu0
      %v1755 = vadd.f32 0.0, %v1754
      %1756 = vmatmul.f32.gmra.mxu0 %v1729
      %v1757 = vpop.f32.mrf.mxu0
      %v1758 = vadd.f32 0.0, %v1757
      %1759 = vmatmul.f32.gmra.mxu0 %v1732
      %v1760 = vpop.f32.mrf.mxu0
      %v1761 = vadd.f32 0.0, %v1760
      %1762 = vdwg.mxu0
      %v1763 = vmul.f32 %v1752, 0.1
      %v1764 = vmul.f32 %v1755, 0.1
      %v1765 = vmul.f32 %v1758, 0.1
      %v1766 = vmul.f32 %v1761, 0.1
      %v1767 = vmul.f32 %v1339, 0.9
      %v1768 = vmul.f32 %v1340, 0.9
      %v1769 = vmul.f32 %v1341, 0.9
      %v1770 = vmul.f32 %v1342, 0.9
      %v1771 = vadd.f32 %v1763, %v1767
      %v1772 = vadd.f32 %v1764, %v1768
      %v1773 = vadd.f32 %v1765, %v1769
      %v1774 = vadd.f32 %v1766, %v1770
      %1775 = vset.pattern.permute.xlu0 1
      %1776 = vperm.xlu0 %1775, %v972
      %v1777 = vpop.permute.xlu0 %1776
      %1779 = vset.pattern.permute.xlu0 1
      %1780 = vperm.xlu0 %1779, %v973
      %v1781 = vpop.permute.xlu0 %1780
      %1783 = vset.pattern.permute.xlu0 1
      %1784 = vperm.xlu0 %1783, %v974
      %v1785 = vpop.permute.xlu0 %1784
      %1787 = vset.pattern.permute.xlu0 1
      %1788 = vperm.xlu0 %1787, %v975
      %v1789 = vpop.permute.xlu0 %1788
      %v1791 = vmul.f32 %v1771, %v1777
      %v1792 = vmul.f32 %v1772, %v1781
      %v1793 = vmul.f32 %v1773, %v1785
      %v1794 = vmul.f32 %v1774, %v1789
      %1795 = vset.pattern.permute.xlu0 2
      %1796 = vperm.xlu0 %1795, %v972
      %v1797 = vpop.permute.xlu0 %1796
      %1799 = vset.pattern.permute.xlu0 2
      %1800 = vperm.xlu0 %1799, %v973
      %v1801 = vpop.permute.xlu0 %1800
      %1803 = vset.pattern.permute.xlu0 2
      %1804 = vperm.xlu0 %1803, %v974
      %v1805 = vpop.permute.xlu0 %1804
      %1807 = vset.pattern.permute.xlu0 2
      %1808 = vperm.xlu0 %1807, %v975
      %v1809 = vpop.permute.xlu0 %1808
      %v1811 = vadd.f32 %v1791, %v1797
      %v1812 = vadd.f32 %v1792, %v1801
      %v1813 = vadd.f32 %v1793, %v1805
      %v1814 = vadd.f32 %v1794, %v1809
      %1815 = vmatpush.xpose.msra.mxu0 0.0
      %1816 = vmatpush.xpose.msra.mxu0 0.0
      %1817 = vmatpush.xpose.msra.mxu0 0.0
      %1818 = vmatpush.xpose.msra.mxu0 0.0
      %1819 = vmatpush.xpose.msra.mxu0 0.0
      %1820 = vmatpush.xpose.msra.mxu0 0.0
      %1821 = vmatpush.xpose.msra.mxu0 0.0
      %1822 = vmatpush.xpose.msra.mxu0 0.0
      %1823 = vmatpush.xpose.msra.mxu0 0.0
      %1824 = vmatpush.xpose.msra.mxu0 0.0
      %1825 = vmatpush.xpose.msra.mxu0 0.0
      %1826 = vmatpush.xpose.msra.mxu0 0.0
      %1827 = vmatpush.xpose.msra.mxu0 %v1615
      %1828 = vmatpush.xpose.msra.mxu0 %v1612
      %1829 = vmatpush.xpose.msra.mxu0 %v1609
      %1830 = vmatpush.xpose.msra.mxu0 %v1606
      %1831 = vmatmul.f32.gmra.mxu0 %v1618
      %v1832 = vpop.f32.mrf.mxu0
      %v1833 = vadd.f32 0.0, %v1832
      %1834 = vmatmul.f32.gmra.mxu0 %v1621
      %v1835 = vpop.f32.mrf.mxu0
      %v1836 = vadd.f32 0.0, %v1835
      %1837 = vmatmul.f32.gmra.mxu0 %v1624
      %v1838 = vpop.f32.mrf.mxu0
      %v1839 = vadd.f32 0.0, %v1838
      %1840 = vmatmul.f32.gmra.mxu0 %v1627
      %v1841 = vpop.f32.mrf.mxu0
      %v1842 = vadd.f32 0.0, %v1841
      %1843 = vdwg.mxu0
      %v1844 = vmul.f32 %v1833, 0.2
      %v1845 = vmul.f32 %v1836, 0.2
      %v1846 = vmul.f32 %v1839, 0.2
      %v1847 = vmul.f32 %v1842, 0.2
      %v1848 = vmax.f32 %v1833, %v1844
      %v1849 = vmax.f32 %v1836, %v1845
      %v1850 = vmax.f32 %v1839, %v1846
      %v1851 = vmax.f32 %v1842, %v1847
      %v1852 = vsel %vm479, %v1848, -inf
      %v1853 = vsel %vm479, %v1849, -inf
      %v1854 = vsel %vm479, %v1850, -inf
      %v1855 = vsel %vm479, %v1851, -inf
      %v1856 = vmax.f32 %v1852, %v1853
      %v1857 = vmax.f32 %v1854, %v1855
      %v1858 = vmax.f32 %v1856, %v1857
      %v1859 = vrot.slane %v1858, 4
      %v1860 = vmax.f32 %v1858, %v1859
      %v1861 = vrot.slane %v1860, 2
      %v1862 = vmax.f32 %v1860, %v1861
      %v1863 = vrot.slane %v1862, 1
      %v1864 = vmax.f32 %v1862, %v1863
      %v1865 = vsub.f32 %v1848, %v1864
      %v1866 = vsub.f32 %v1849, %v1864
      %v1867 = vsub.f32 %v1850, %v1864
      %v1868 = vsub.f32 %v1851, %v1864
      %v1869 = vmul.f32 %v1865, 1.442695
      %v1870 = vpow.pop %v1869
      %v1871 = vmul.f32 %v1866, 1.442695
      %v1872 = vpow.pop %v1871
      %v1873 = vmul.f32 %v1867, 1.442695
      %v1874 = vpow.pop %v1873
      %v1875 = vmul.f32 %v1868, 1.442695
      %v1876 = vpow.pop %v1875
      %v1877 = vsel %vm479, %v1870, 0.0
      %v1878 = vsel %vm479, %v1872, 0.0
      %v1879 = vadd.f32 %v1877, %v1878
      %v1880 = vsel %vm479, %v1874, 0.0
      %v1881 = vadd.f32 %v1879, %v1880
      %v1882 = vsel %vm479, %v1876, 0.0
      %v1883 = vadd.f32 %v1881, %v1882
      %v1884 = vrot.slane %v1883, 4
      %v1885 = vadd.f32 %v1883, %v1884
      %v1886 = vrot.slane %v1885, 2
      %v1887 = vadd.f32 %v1885, %v1886
      %v1888 = vrot.slane %v1887, 1
      %v1889 = vadd.f32 %v1887, %v1888
      %v1890 = vrcp.pop %v1889
      %v1891 = vmul.f32 %v1889, %v1890
      %v1892 = vsub.f32 1.0, %v1891
      %v1893 = vmul.f32 %v1890, %v1892
      %v1894 = vadd.f32 %v1890, %v1893
      %vm1895 = vweird.f32 %v1889
      %vm1896 = vweird.f32 %v1890
      %vm1897 = vmor %vm1895, %vm1896
      %v1898 = vsel %vm1897, %v1890, %v1894
      %v1899 = vand.u32 2147483647, %v1889
      %vm1900 = vcmp.eq.f32.partialorder %v1899, 8.507059e+37
      %v1901 = vand.u32 %v1889, 2147483648
      %v1902 = vor.u32 1.1754944e-38, %v1901
      %v1903 = vsel %vm1900, %v1902, %v1898
      %v1904 = vmul.f32 %v1870, %v1903
      %v1905 = vmul.f32 %v1872, %v1903
      %v1906 = vmul.f32 %v1874, %v1903
      %v1907 = vmul.f32 %v1876, %v1903
      %v1909 = vsel %vm479, %v1904, 0
      %v1912 = vsel %vm479, %v1905, 0
      %v1915 = vsel %vm479, %v1906, 0
      %v1918 = vsel %vm479, %v1907, 0
      %1920 = vmatpush.msra.mxu0 0.0
      %1921 = vmatpush.msra.mxu0 0.0
      %1922 = vmatpush.msra.mxu0 0.0
      %1923 = vmatpush.msra.mxu0 0.0
      %1924 = vmatpush.msra.mxu0 0.0
      %1925 = vmatpush.msra.mxu0 0.0
      %1926 = vmatpush.msra.mxu0 0.0
      %1927 = vmatpush.msra.mxu0 0.0
      %1928 = vmatpush.msra.mxu0 0.0
      %1929 = vmatpush.msra.mxu0 0.0
      %1930 = vmatpush.msra.mxu0 0.0
      %1931 = vmatpush.msra.mxu0 0.0
      %1932 = vmatpush.msra.mxu0 %v1603
      %1933 = vmatpush.msra.mxu0 %v1602
      %1934 = vmatpush.msra.mxu0 %v1601
      %1935 = vmatpush.msra.mxu0 %v1600
      %1936 = vmatmul.f32.gmra.mxu0 %v1909
      %v1937 = vpop.f32.mrf.mxu0
      %v1938 = vadd.f32 0.0, %v1937
      %1939 = vmatmul.f32.gmra.mxu0 %v1912
      %v1940 = vpop.f32.mrf.mxu0
      %v1941 = vadd.f32 0.0, %v1940
      %1942 = vmatmul.f32.gmra.mxu0 %v1915
      %v1943 = vpop.f32.mrf.mxu0
      %v1944 = vadd.f32 0.0, %v1943
      %1945 = vmatmul.f32.gmra.mxu0 %v1918
      %v1946 = vpop.f32.mrf.mxu0
      %v1947 = vadd.f32 0.0, %v1946
      %1948 = vdwg.mxu0
      %v1949 = vmul.f32 %v1938, 0.1
      %v1950 = vmul.f32 %v1941, 0.1
      %v1951 = vmul.f32 %v1944, 0.1
      %v1952 = vmul.f32 %v1947, 0.1
      %v1953 = vmul.f32 %v1600, 0.9
      %v1954 = vmul.f32 %v1601, 0.9
      %v1955 = vmul.f32 %v1602, 0.9
      %v1956 = vmul.f32 %v1603, 0.9
      %v1957 = vadd.f32 %v1949, %v1953
      %v1958 = vadd.f32 %v1950, %v1954
      %v1959 = vadd.f32 %v1951, %v1955
      %v1960 = vadd.f32 %v1952, %v1956
      %v1961 = vmul.f32 %v1957, %v1777
      %v1962 = vmul.f32 %v1958, %v1781
      %v1963 = vmul.f32 %v1959, %v1785
      %v1964 = vmul.f32 %v1960, %v1789
      %v1965 = vadd.f32 %v1961, %v1797
      %v1966 = vadd.f32 %v1962, %v1801
      %v1967 = vadd.f32 %v1963, %v1805
      %v1968 = vadd.f32 %v1964, %v1809
      %v1970 = vsel %vm1604, %v1811, 0
      %v1973 = vsel %vm1604, %v1812, 0
      %v1976 = vsel %vm1604, %v1813, 0
      %v1979 = vsel %vm1604, %v1814, 0
      %vm1981 = vcmask 1043456
      %v1983 = vsel %vm1981, %v417, 0
      %1985 = vmatpush.msra.mxu0 0.0
      %1986 = vmatpush.msra.mxu0 0.0
      %1987 = vmatpush.msra.mxu0 0.0
      %1988 = vmatpush.msra.mxu0 0.0
      %1989 = vmatpush.msra.mxu0 0.0
      %1990 = vmatpush.msra.mxu0 0.0
      %1991 = vmatpush.msra.mxu0 0.0
      %1992 = vmatpush.msra.mxu0 0.0
      %1993 = vmatpush.msra.mxu0 0.0
      %1994 = vmatpush.msra.mxu0 0.0
      %1995 = vmatpush.msra.mxu0 0.0
      %1996 = vmatpush.msra.mxu0 0.0
      %1997 = vmatpush.msra.mxu0 0.0
      %1998 = vmatpush.msra.mxu0 0.0
      %1999 = vmatpush.msra.mxu0 %v1983
      %2000 = vmatpush.msra.mxu0 %v416
      %2001 = vmatmul.f32.gmra.mxu0 %v1970
      %v2002 = vpop.f32.mrf.mxu0
      %v2003 = vadd.f32 0.0, %v2002
      %2004 = vmatmul.f32.gmra.mxu0 %v1973
      %v2005 = vpop.f32.mrf.mxu0
      %v2006 = vadd.f32 0.0, %v2005
      %2007 = vmatmul.f32.gmra.mxu0 %v1976
      %v2008 = vpop.f32.mrf.mxu0
      %v2009 = vadd.f32 0.0, %v2008
      %2010 = vmatmul.f32.gmra.mxu0 %v1979
      %v2011 = vpop.f32.mrf.mxu0
      %v2012 = vadd.f32 0.0, %v2011
      %2013 = vdwg.mxu0
      %v2015 = vsel %vm1981, %v427, 0
      %2017 = vmatpush.msra.mxu0 0.0
      %2018 = vmatpush.msra.mxu0 0.0
      %2019 = vmatpush.msra.mxu0 0.0
      %2020 = vmatpush.msra.mxu0 0.0
      %2021 = vmatpush.msra.mxu0 0.0
      %2022 = vmatpush.msra.mxu0 0.0
      %2023 = vmatpush.msra.mxu0 0.0
      %2024 = vmatpush.msra.mxu0 0.0
      %2025 = vmatpush.msra.mxu0 0.0
      %2026 = vmatpush.msra.mxu0 0.0
      %2027 = vmatpush.msra.mxu0 0.0
      %2028 = vmatpush.msra.mxu0 0.0
      %2029 = vmatpush.msra.mxu0 0.0
      %2030 = vmatpush.msra.mxu0 0.0
      %2031 = vmatpush.msra.mxu0 %v2015
      %2032 = vmatpush.msra.mxu0 %v426
      %2033 = vmatmul.f32.gmra.mxu0 %v1970
      %v2034 = vpop.f32.mrf.mxu0
      %v2035 = vadd.f32 0.0, %v2034
      %2036 = vmatmul.f32.gmra.mxu0 %v1973
      %v2037 = vpop.f32.mrf.mxu0
      %v2038 = vadd.f32 0.0, %v2037
      %2039 = vmatmul.f32.gmra.mxu0 %v1976
      %v2040 = vpop.f32.mrf.mxu0
      %v2041 = vadd.f32 0.0, %v2040
      %2042 = vmatmul.f32.gmra.mxu0 %v1979
      %v2043 = vpop.f32.mrf.mxu0
      %v2044 = vadd.f32 0.0, %v2043
      %2045 = vdwg.mxu0
      %v2046 = vmax.f32 %v2003, %v2035
      %v2047 = vmax.f32 %v2006, %v2038
      %v2048 = vmax.f32 %v2009, %v2041
      %v2049 = vmax.f32 %v2012, %v2044
      %v2050 = vmax.f32 %v2046, 0.0
      %v2051 = vmax.f32 %v2047, 0.0
      %v2052 = vmax.f32 %v2048, 0.0
      %v2053 = vmax.f32 %v2049, 0.0
      %v2055 = vsel %vm1604, %v1965, 0
      %v2058 = vsel %vm1604, %v1966, 0
      %v2061 = vsel %vm1604, %v1967, 0
      %v2064 = vsel %vm1604, %v1968, 0
      %2066 = vmatpush.msra.mxu0 0.0
      %2067 = vmatpush.msra.mxu0 0.0
      %2068 = vmatpush.msra.mxu0 0.0
      %2069 = vmatpush.msra.mxu0 0.0
      %2070 = vmatpush.msra.mxu0 0.0
      %2071 = vmatpush.msra.mxu0 0.0
      %2072 = vmatpush.msra.mxu0 0.0
      %2073 = vmatpush.msra.mxu0 0.0
      %2074 = vmatpush.msra.mxu0 0.0
      %2075 = vmatpush.msra.mxu0 0.0
      %2076 = vmatpush.msra.mxu0 0.0
      %2077 = vmatpush.msra.mxu0 0.0
      %2078 = vmatpush.msra.mxu0 0.0
      %2079 = vmatpush.msra.mxu0 0.0
      %2080 = vmatpush.msra.mxu0 %v1983
      %2081 = vmatpush.msra.mxu0 %v416
      %2082 = vmatmul.f32.gmra.mxu0 %v2055
      %v2083 = vpop.f32.mrf.mxu0
      %v2084 = vadd.f32 0.0, %v2083
      %2085 = vmatmul.f32.gmra.mxu0 %v2058
      %v2086 = vpop.f32.mrf.mxu0
      %v2087 = vadd.f32 0.0, %v2086
      %2088 = vmatmul.f32.gmra.mxu0 %v2061
      %v2089 = vpop.f32.mrf.mxu0
      %v2090 = vadd.f32 0.0, %v2089
      %2091 = vmatmul.f32.gmra.mxu0 %v2064
      %v2092 = vpop.f32.mrf.mxu0
      %v2093 = vadd.f32 0.0, %v2092
      %2094 = vdwg.mxu0
      %2095 = vmatpush.msra.mxu0 0.0
      %2096 = vmatpush.msra.mxu0 0.0
      %2097 = vmatpush.msra.mxu0 0.0
      %2098 = vmatpush.msra.mxu0 0.0
      %2099 = vmatpush.msra.mxu0 0.0
      %2100 = vmatpush.msra.mxu0 0.0
      %2101 = vmatpush.msra.mxu0 0.0
      %2102 = vmatpush.msra.mxu0 0.0
      %2103 = vmatpush.msra.mxu0 0.0
      %2104 = vmatpush.msra.mxu0 0.0
      %2105 = vmatpush.msra.mxu0 0.0
      %2106 = vmatpush.msra.mxu0 0.0
      %2107 = vmatpush.msra.mxu0 0.0
      %2108 = vmatpush.msra.mxu0 0.0
      %2109 = vmatpush.msra.mxu0 %v2015
      %2110 = vmatpush.msra.mxu0 %v426
      %2111 = vmatmul.f32.gmra.mxu0 %v2055
      %v2112 = vpop.f32.mrf.mxu0
      %v2113 = vadd.f32 0.0, %v2112
      %2114 = vmatmul.f32.gmra.mxu0 %v2058
      %v2115 = vpop.f32.mrf.mxu0
      %v2116 = vadd.f32 0.0, %v2115
      %2117 = vmatmul.f32.gmra.mxu0 %v2061
      %v2118 = vpop.f32.mrf.mxu0
      %v2119 = vadd.f32 0.0, %v2118
      %2120 = vmatmul.f32.gmra.mxu0 %v2064
      %v2121 = vpop.f32.mrf.mxu0
      %v2122 = vadd.f32 0.0, %v2121
      %2123 = vdwg.mxu0
      %v2124 = vmax.f32 %v2084, %v2113
      %v2125 = vmax.f32 %v2087, %v2116
      %v2126 = vmax.f32 %v2090, %v2119
      %v2127 = vmax.f32 %v2093, %v2122
      %v2128 = vmax.f32 %v2124, 0.0
      %v2129 = vmax.f32 %v2125, 0.0
      %v2130 = vmax.f32 %v2126, 0.0
      %v2131 = vmax.f32 %v2127, 0.0
      %2136 = vrot.lane.b32.xlu0 %v2128, 6
      %v2137 = vpop.permute.xlu0 %2136
      %2138 = vrot.lane.b32.xlu0 %v2129, 6
      %v2139 = vpop.permute.xlu0 %2138
      %2140 = vrot.lane.b32.xlu0 %v2130, 6
      %v2141 = vpop.permute.xlu0 %2140
      %2142 = vrot.lane.b32.xlu0 %v2131, 6
      %v2143 = vpop.permute.xlu0 %2142
      %vm2148 = vcmask 48128
      %v2149 = vsel %vm2148, %v2050, %v2137
      %v2150 = vsel %vm2148, %v2051, %v2139
      %v2151 = vsel %vm2148, %v2052, %v2141
      %v2152 = vsel %vm2148, %v2053, %v2143
      %2153 = vst.msk [vmem:[%s224] sm:$0xff] %vm1604, %v2149
      %2154 = vst.msk [vmem:[%s224 + $0x8] sm:$0xff] %vm1604, %v2150
      %2155 = vst.msk [vmem:[%s224 + $0x10] sm:$0xff] %vm1604, %v2151
      %2156 = vst.msk [vmem:[%s224 + $0x18] sm:$0xff] %vm1604, %v2152
      %p2157 = scmp.lt.s32.totalorder %s16, 1
      %s2158 = scalar_select %p2157, %s16, 1
      %s2159 = smul.addr %s2158, 4
      %s2160 = smul.addr %s2159, 8
      %s2161 = scalar_lea.vmem %s5, %s2160
      // Predicated region
      $region41: #{appnp_forward.1} parent=39 // pred_check
        %p2162 = pneg %p144
      $region42: #{appnp_forward.1} parent=39 // pred_check_branch
        %2164 = sbr.rel (%p2162) target = $region44
      $region43: #{appnp_forward.1} parent=39 // pred_region
        _
      $region44: #{appnp_forward.1} parent=39 // pred_fallthru
        _
    $region40: #{appnp_forward.1} parent=5 // pred_fallthru
      _
    %p2165 = scmp.le.s32.totalorder 2, %s11
    // Predicated region
    $region45: #{appnp_forward.1} parent=5 // pred_check
      %p2166 = pneg %p2165
    $region46: #{appnp_forward.1} parent=5 // pred_check_branch
      %2168 = sbr.rel (%p2166) target = $region48
    $region47: #{appnp_forward.1} parent=5 // pred_region
      %s2169 = ssub.s32 %s11, 2
      // Predicated region
      $region49: #{appnp_forward.1} parent=47 // pred_check
        %p2170 = pneg %p150
      $region50: #{appnp_forward.1} parent=47 // pred_check_branch
        %2172 = sbr.rel (%p2170) target = $region52
      $region51: #{appnp_forward.1} parent=47 // pred_region
        %p2173 = scmp.lt.s32.totalorder %s17, 1
        %s2174 = scalar_select %p2173, %s17, 1
        %s2175 = smul.addr %s2174, 4
        %s2176 = smul.addr %s2175, 8
        %s2177 = scalar_lea.vmem %s5, %s2176
      $region52: #{appnp_forward.1} parent=47 // pred_fallthru
        _
    $region48: #{appnp_forward.1} parent=5 // pred_fallthru
      _
  $region6: #{appnp_forward.1} parent=0 // loop_footer
    %s15 = sadd.s32 1, %s11
  $region7: #{appnp_forward.1} parent=0 // loop_footer_branch
    %10 = sbr.rel target = $region3
  $region8: #{appnp_forward.1} parent=0 // loop_exit
    _

</llo_original>
